<compile_context>
chip_gen: v7x
topology: tpu7x:2x2x1
jax: 0.10.0
libtpu: 0.0.40
codegen_flags: <defaults>
</compile_context>

<pallas_src>
import functools

import jax
import jax.numpy as jnp
from jax.experimental import pallas as pl
from jax.experimental.pallas import tpu as pltpu


# ------------------------- Pallas kernel -------------------------


def _patch_expand_kernel(x_ref, w_ref, gamma_ref, beta_ref, o_ref, y_ref, *,
                         zb, hb, W, C, r, c_half, eps):
    # x_ref:     (zb, hb*W, C)              input voxels of the tile (native dtype)
    # w_ref:     (C, N), N = r^3*c_half     permuted conv weight (cols: rz,ry,rx,c)
    # gamma_ref: (1, c_half), beta_ref: (1, c_half)   LayerNorm affine (f32)
    # o_ref:     (zb, r, hb, r, W, r*c_half) pixel-shuffled output (native dtype)
    # y_ref:     (zb*hb*W, N) f32 scratch    conv result
    M = zb * hb * W
    rc = r * c_half

    # 1x1x1 conv == one MXU matmul over every voxel of the tile, f32 accumulation.
    # (hb*W is chosen % 8 == 0, so this reshape is a free view.)
    x2 = x_ref[...].reshape(M, C)
    y_ref[...] = jnp.dot(x2, w_ref[...], preferred_element_type=jnp.float32)

    gamma = gamma_ref[...]          # (1, c_half) f32
    beta = beta_ref[...]

    # LayerNorm per c_half-lane group, fully off the MXU (XLU reduce + VPU + EUP),
    # fused with the pixel-shuffle store.  Each (rz, ry) slab is one full-width
    # (zb, hb, W, rc) store whose memory order already equals the final token order.
    for rz in range(r):
        for ry in range(r):
            parts = []
            for rx in range(r):
                g = (rz * r + ry) * r + rx
                yg = y_ref[:, g * c_half:(g + 1) * c_half]          # (M, c_half) f32
                mu = jnp.mean(yg, axis=-1, keepdims=True)           # lane reduce
                yc = yg - mu
                var = jnp.mean(yc * yc, axis=-1, keepdims=True)
                parts.append(yc * jax.lax.rsqrt(var + eps) * gamma + beta)
            slab = jnp.concatenate(parts, axis=-1) if r > 1 else parts[0]   # (M, rc)
            o_ref[:, rz, :, ry, :, :] = (
                slab.reshape(zb, hb, W, rc).astype(o_ref.dtype))


# ------------------------- Helpers -------------------------


def _round_up(v, m):
    return (v + m - 1) // m * m


def _pad2d_bytes(rows, cols, itemsize):
    sub = 8 * (4 // itemsize)  # f32 -> 8 sublanes, bf16 -> 16
    return _round_up(max(rows, 1), sub) * _round_up(max(cols, 1), 128) * itemsize


def _vmem_capacity_bytes():
    """Physical VMEM per core; conservative 64 MiB (v7x) if the query fails."""
    try:
        info = pltpu.get_tpu_info()
        for attr in ("vmem_capacity_bytes", "vmem_size_bytes", "vmem_bytes"):
            v = getattr(info, attr, None)
            if v:
                return int(v)
    except Exception:
        pass
    return 64 << 20


def _estimate_vmem(zb, hb, W, C, N, rc, r, in_isz, out_isz):
    """Per-step VMEM footprint: pipelined blocks + resident weight + scratch + live temps."""
    M = zb * hb * W
    x_blk = 2 * zb * _pad2d_bytes(hb * W, C, in_isz)              # double-buffered input
    o_blk = 2 * zb * r * hb * r * _pad2d_bytes(W, rc, out_isz)    # double-buffered output
    w_res = 2 * _pad2d_bytes(C, N, in_isz)                        # resident weight
    y_scr = _pad2d_bytes(M, N, 4)                                 # f32 conv-result scratch
    live = (4 * _pad2d_bytes(M, rc, 4)                            # slab temporaries
            + 4 * _pad2d_bytes(M, 128, 4)                         # per-group stats
            + _pad2d_bytes(M, C, in_isz))                         # possible x reshape copy
    small = 8 * _pad2d_bytes(1, max(rc, 128), 4)
    return int(1.3 * (x_blk + o_blk + w_res + y_scr + live + small)) + (2 << 20)


def _choose_tiles(BZ, H, W, C, N, rc, r, in_isz, out_isz, budget):
    """Pick (zb, hb): z-planes and H-rows per grid step.

    hb | H with (hb*W) % 8 == 0 (or hb == H) so the x block obeys the (8,128) rule
    and the in-kernel reshape is free; zb | BZ.  Prefer >= 4 total grid steps
    (pipelining / megacore) and the largest tile whose VMEM estimate fits `budget`.
    """
    hb_cands = [d for d in range(1, H + 1)
                if H % d == 0 and ((d * W) % 8 == 0 or d == H)]
    zb_cands = [d for d in range(1, BZ + 1) if BZ % d == 0]
    min_total = min(4, H * BZ)

    for target_rows in (8192, 4096, 2048, 1024, 512, 256, 128, 64, 32, 16, 8, 4, 2, 1):
        fits = [d for d in hb_cands if d * W <= target_rows]
        pref = [d for d in fits if (H // d) * BZ >= min_total]
        hb = max(pref) if pref else (max(fits) if fits else min(hb_cands))
        steps_h = H // hb
        ok = [d for d in zb_cands if d == 1 or d * hb * W <= target_rows]
        good = [d for d in ok if (BZ // d) * steps_h >= min_total]
        zb = max(good) if good else 1
        if _estimate_vmem(zb, hb, W, C, N, rc, r, in_isz, out_isz) <= budget:
            return zb, hb
    return 1, min(hb_cands)


# ------------------------- Module forward -------------------------


def patch_expanding_forward(x, conv_weight, gamma, beta, *, input_resolution, dim,
                            dim_scale=2, return_vector=True, eps=1e-5):
    """Forward pass of PatchExpanding.

    x:           (B, L, C) with L = Z*H*W, C = dim  (any float dtype; kept as-is)
    conv_weight: (dim*dim_scale^3//2, dim, 1, 1, 1)  (PyTorch Conv3d layout)
    gamma/beta:  (dim//2,)
    """
    Z, H, W = input_resolution
    B, L, C = x.shape
    assert L == Z * H * W, f"input feature has wrong size {L} != {Z},{H},{W}"
    assert Z % 2 == 0 and H % 2 == 0 and W % 2 == 0
    assert C == dim and dim % 2 == 0
    r = dim_scale
    c_half = dim // 2
    N = dim * r ** 3 // 2               # = r^3 * c_half
    rc = r * c_half
    BZ = B * Z
    out_dtype = x.dtype
    assert conv_weight.shape[0] == N and conv_weight.shape[1] == dim

    # --- one-time parameter preprocessing (tiny, XLA glue) ---
    # Conv-weight rows are ordered o = (c, rz, ry, rx); permute to (rz, ry, rx, c)
    # so each matmul output row holds r^3 contiguous LayerNorm groups of c_half.
    w2 = conv_weight.reshape(N, dim)
    wp = (w2.reshape(c_half, r, r, r, dim)
            .transpose(1, 2, 3, 0, 4)
            .reshape(N, dim)
            .T).astype(x.dtype)                                   # (C, N), native dtype
    gamma_r = gamma.astype(jnp.float32).reshape(1, c_half)
    beta_r = beta.astype(jnp.float32).reshape(1, c_half)

    # --- tiling / grid ---
    in_isz = jnp.dtype(x.dtype).itemsize
    out_isz = jnp.dtype(out_dtype).itemsize
    capacity = _vmem_capacity_bytes()
    budget = int(0.70 * capacity)
    zb, hb = _choose_tiles(BZ, H, W, C, N, rc, r, in_isz, out_isz, budget)
    M = zb * hb * W
    est = _estimate_vmem(zb, hb, W, C, N, rc, r, in_isz, out_isz)
    vmem_limit = int(min(int(0.75 * capacity), max(32 << 20, est + (8 << 20))))

    x3 = x.reshape(BZ, H * W, C)
    grid = (BZ // zb, H // hb)

    kernel = functools.partial(_patch_expand_kernel, zb=zb, hb=hb, W=W, C=C,
                               r=r, c_half=c_half, eps=eps)

    out = pl.pallas_call(
        kernel,
        out_shape=jax.ShapeDtypeStruct((BZ, r, H, r, W, rc), out_dtype),
        grid_spec=pltpu.PrefetchScalarGridSpec(
            num_scalar_prefetch=0,
            grid=grid,
            in_specs=[
                pl.BlockSpec((zb, hb * W, C), lambda i, j: (i, j, 0)),
                pl.BlockSpec((C, N), lambda i, j: (0, 0)),        # weight: VMEM-resident
                pl.BlockSpec((1, c_half), lambda i, j: (0, 0)),
                pl.BlockSpec((1, c_half), lambda i, j: (0, 0)),
            ],
            out_specs=pl.BlockSpec((zb, r, hb, r, W, rc),
                                   lambda i, j: (i, 0, j, 0, 0, 0)),
            scratch_shapes=[pltpu.VMEM((M, N), jnp.float32)],
        ),
        compiler_params=pltpu.CompilerParams(
            dimension_semantics=("parallel", "parallel"),
            vmem_limit_bytes=vmem_limit,
        ),
    )(x3, wp, gamma_r, beta_r)

    # Memory order of `out` already equals the final (b, z, rz, h, ry, w, rx, c)
    # token order: this reshape is free (no transpose, no extra HBM pass).
    out = out.reshape(B, L * r ** 3, c_half)
    if not return_vector:
        out = jnp.transpose(out, (0, 2, 1)).reshape(B, c_half, Z * r, H * r, W * r)
    return out


# ------------------------- Reference (pure JAX) -------------------------


def _reference_forward(x, conv_weight, gamma, beta, *, input_resolution, dim,
                       dim_scale=2, eps=1e-5):
    Z, H, W = input_resolution
    B, L, C = x.shape
    r = dim_scale
    c_half = dim // 2
    n_out_ch = dim * r ** 3 // 2
    wt = conv_weight.reshape(n_out_ch, dim)
    y = jnp.einsum("blc,oc->blo", x, wt,
                   precision=jax.lax.Precision.HIGHEST)           # (B, L, n_out_ch)
    y = y.reshape(B, Z, H, W, c_half, r, r, r)
    y = jnp.transpose(y, (0, 1, 5, 2, 6, 3, 7, 4)).reshape(B, L * r ** 3, c_half)
    mean = jnp.mean(y, axis=-1, keepdims=True)
    var = jnp.mean((y - mean) ** 2, axis=-1, keepdims=True)
    return (y - mean) / jnp.sqrt(var + eps) * gamma + beta


# ------------------------- Main -------------------------


if __name__ == "__main__":
    B = 2
    Z, H, W = 4, 4, 4
    dim = 32
    dim_scale = 2
    L = Z * H * W
    c_half = dim // 2
    n_out_ch = dim * dim_scale ** 3 // 2

    key = jax.random.PRNGKey(0)
    k_x, k_w, k_g, k_b = jax.random.split(key, 4)
    x = jax.random.normal(k_x, (B, L, dim), dtype=jnp.float32)
    conv_weight = 0.02 * jax.random.normal(k_w, (n_out_ch, dim, 1, 1, 1),
                                           dtype=jnp.float32)
    gamma = 1.0 + 0.1 * jax.random.normal(k_g, (c_half,), dtype=jnp.float32)
    beta = 0.1 * jax.random.normal(k_b, (c_half,), dtype=jnp.float32)

    fwd = functools.partial(
        patch_expanding_forward,
        input_resolution=(Z, H, W),
        dim=dim,
        dim_scale=dim_scale,
        return_vector=True,
    )

    # f32 path: check against the pure-JAX reference.
    out = jax.block_until_ready(jax.jit(fwd)(x, conv_weight, gamma, beta))
    assert out.shape == (B, L * dim_scale ** 3, c_half), out.shape
    assert out.dtype == x.dtype

    ref = _reference_forward(
        x, conv_weight, gamma, beta,
        input_resolution=(Z, H, W), dim=dim, dim_scale=dim_scale)
    max_err = float(jnp.max(jnp.abs(out - ref)))
    assert jnp.allclose(out, ref, atol=2e-4, rtol=2e-4), f"max|diff|={max_err}"

    # bf16 smoke test: native-dtype I/O with f32 accumulation / f32 LN math inside.
    out_bf16 = jax.block_until_ready(
        jax.jit(fwd)(x.astype(jnp.bfloat16), conv_weight.astype(jnp.bfloat16),
                     gamma, beta))
    assert out_bf16.shape == out.shape
    assert out_bf16.dtype == jnp.bfloat16
    assert float(jnp.max(jnp.abs(out_bf16.astype(jnp.float32) - ref))) < 0.25

    print("KERNEL_OK")
</pallas_src>

<mosaic_0001>
module attributes {stable_mosaic.version = 11 : i64} {
  func.func @_patch_expand_kernel(%arg0: i32, %arg1: i32, %arg2: memref<2x16x32xf32, #tpu.memory_space<vmem>>, %arg3: memref<32x128xf32, #tpu.memory_space<vmem>>, %arg4: memref<1x16xf32, #tpu.memory_space<vmem>>, %arg5: memref<1x16xf32, #tpu.memory_space<vmem>>, %arg6: memref<2x2x4x2x4x32xf32, #tpu.memory_space<vmem>>, %arg7: memref<32x128xf32, #tpu.memory_space<vmem>>) attributes {dimension_semantics = [#tpu.dimension_semantics<parallel>, #tpu.dimension_semantics<parallel>], iteration_bounds = array<i64: 4, 1>, scalar_prefetch = 0 : i64, scratch_operands = 1 : i64, tpu.core_type = #tpu.core_type<tc>, window_params = [{transform_indices = @transform_0, window_bounds = array<i64: 2, 16, 32>}, {pipeline_mode = #tpu.pipeline_mode<synchronous>, transform_indices = @transform_1, window_bounds = array<i64: 32, 128>}, {pipeline_mode = #tpu.pipeline_mode<synchronous>, transform_indices = @transform_2, window_bounds = array<i64: 1, 16>}, {pipeline_mode = #tpu.pipeline_mode<synchronous>, transform_indices = @transform_3, window_bounds = array<i64: 1, 16>}, {transform_indices = @transform_4, window_bounds = array<i64: 2, 2, 4, 2, 4, 32>}]} {
    %c0 = arith.constant 0 : index
    %c0_0 = arith.constant 0 : index
    %c0_1 = arith.constant 0 : index
    %0 = vector.load %arg2[%c0, %c0_0, %c0_1] : memref<2x16x32xf32, #tpu.memory_space<vmem>>, vector<2x16x32xf32>
    %1 = vector.shape_cast %0 : vector<2x16x32xf32> to vector<32x32xf32>
    %c0_2 = arith.constant 0 : index
    %c0_3 = arith.constant 0 : index
    %2 = vector.load %arg3[%c0_2, %c0_3] : memref<32x128xf32, #tpu.memory_space<vmem>>, vector<32x128xf32>
    %cst = arith.constant dense<0.000000e+00> : vector<32x128xf32>
    %3 = tpu.matmul %1, %2, %cst {dimension_numbers = #tpu.dot_dimension_numbers<[1], [0], [0], [1], [0, 0, 1, 1], [], []>} : vector<32x32xf32>, vector<32x128xf32>, vector<32x128xf32> -> vector<32x128xf32>
    %c0_4 = arith.constant 0 : index
    %c0_5 = arith.constant 0 : index
    %4 = vector.load %arg7[%c0_4, %c0_5] : memref<32x128xf32, #tpu.memory_space<vmem>>, vector<32x128xf32>
    tpu.vector_store %arg7[%c0_4, %c0_5], %3 {strides = array<i32>} : memref<32x128xf32, #tpu.memory_space<vmem>>, vector<32x128xf32>,
    %c0_6 = arith.constant 0 : index
    %c0_7 = arith.constant 0 : index
    %5 = vector.load %arg4[%c0_6, %c0_7] : memref<1x16xf32, #tpu.memory_space<vmem>>, vector<1x16xf32>
    %c0_8 = arith.constant 0 : index
    %c0_9 = arith.constant 0 : index
    %6 = vector.load %arg5[%c0_8, %c0_9] : memref<1x16xf32, #tpu.memory_space<vmem>>, vector<1x16xf32>
    %c0_10 = arith.constant 0 : index
    %c0_11 = arith.constant 0 : index
    %7 = vector.load %arg7[%c0_10, %c0_11] : memref<32x128xf32, #tpu.memory_space<vmem>>, vector<32x16xf32>
    %cst_12 = arith.constant dense<0.000000e+00> : vector<32xf32>
    %8 = vector.multi_reduction <add>, %7, %cst_12 [1] : vector<32x16xf32> to vector<32xf32>
    %9 = vector.shape_cast %8 : vector<32xf32> to vector<32x1xf32>
    %cst_13 = arith.constant 1.600000e+01 : f32
    %10 = vector.broadcast %cst_13 : f32 to vector<32x1xf32>
    %11 = arith.divf %9, %10 : vector<32x1xf32>
    %12 = vector.broadcast %11 : vector<32x1xf32> to vector<32x16xf32>
    %13 = arith.subf %7, %12 : vector<32x16xf32>
    %14 = arith.mulf %13, %13 : vector<32x16xf32>
    %cst_14 = arith.constant dense<0.000000e+00> : vector<32xf32>
    %15 = vector.multi_reduction <add>, %14, %cst_14 [1] : vector<32x16xf32> to vector<32xf32>
    %16 = vector.shape_cast %15 : vector<32xf32> to vector<32x1xf32>
    %cst_15 = arith.constant 1.600000e+01 : f32
    %17 = vector.broadcast %cst_15 : f32 to vector<32x1xf32>
    %18 = arith.divf %16, %17 : vector<32x1xf32>
    %cst_16 = arith.constant 9.99999974E-6 : f32
    %19 = vector.broadcast %cst_16 : f32 to vector<32x1xf32>
    %20 = arith.addf %18, %19 : vector<32x1xf32>
    %21 = math.rsqrt %20 : vector<32x1xf32>
    %22 = vector.broadcast %21 : vector<32x1xf32> to vector<32x16xf32>
    %23 = arith.mulf %13, %22 : vector<32x16xf32>
    %24 = vector.broadcast %5 : vector<1x16xf32> to vector<32x16xf32>
    %25 = arith.mulf %23, %24 : vector<32x16xf32>
    %26 = vector.broadcast %6 : vector<1x16xf32> to vector<32x16xf32>
    %27 = arith.addf %25, %26 : vector<32x16xf32>
    %c0_17 = arith.constant 0 : index
    %c16 = arith.constant 16 : index
    %28 = vector.load %arg7[%c0_17, %c16] : memref<32x128xf32, #tpu.memory_space<vmem>>, vector<32x16xf32>
    %cst_18 = arith.constant dense<0.000000e+00> : vector<32xf32>
    %29 = vector.multi_reduction <add>, %28, %cst_18 [1] : vector<32x16xf32> to vector<32xf32>
    %30 = vector.shape_cast %29 : vector<32xf32> to vector<32x1xf32>
    %cst_19 = arith.constant 1.600000e+01 : f32
    %31 = vector.broadcast %cst_19 : f32 to vector<32x1xf32>
    %32 = arith.divf %30, %31 : vector<32x1xf32>
    %33 = vector.broadcast %32 : vector<32x1xf32> to vector<32x16xf32>
    %34 = arith.subf %28, %33 : vector<32x16xf32>
    %35 = arith.mulf %34, %34 : vector<32x16xf32>
    %cst_20 = arith.constant dense<0.000000e+00> : vector<32xf32>
    %36 = vector.multi_reduction <add>, %35, %cst_20 [1] : vector<32x16xf32> to vector<32xf32>
    %37 = vector.shape_cast %36 : vector<32xf32> to vector<32x1xf32>
    %cst_21 = arith.constant 1.600000e+01 : f32
    %38 = vector.broadcast %cst_21 : f32 to vector<32x1xf32>
    %39 = arith.divf %37, %38 : vector<32x1xf32>
    %cst_22 = arith.constant 9.99999974E-6 : f32
    %40 = vector.broadcast %cst_22 : f32 to vector<32x1xf32>
    %41 = arith.addf %39, %40 : vector<32x1xf32>
    %42 = math.rsqrt %41 : vector<32x1xf32>
    %43 = vector.broadcast %42 : vector<32x1xf32> to vector<32x16xf32>
    %44 = arith.mulf %34, %43 : vector<32x16xf32>
    %45 = vector.broadcast %5 : vector<1x16xf32> to vector<32x16xf32>
    %46 = arith.mulf %44, %45 : vector<32x16xf32>
    %47 = vector.broadcast %6 : vector<1x16xf32> to vector<32x16xf32>
    %48 = arith.addf %46, %47 : vector<32x16xf32>
    %49 = tpu.concatenate %27, %48 in 1 : vector<32x16xf32>, vector<32x16xf32> -> vector<32x32xf32>
    %50 = vector.shape_cast %49 : vector<32x32xf32> to vector<2x4x4x32xf32>
    %c0_23 = arith.constant 0 : index
    %c0_24 = arith.constant 0 : index
    %c0_25 = arith.constant 0 : index
    %c0_26 = arith.constant 0 : index
    %c0_27 = arith.constant 0 : index
    %c0_28 = arith.constant 0 : index
    %51 = vector.load %arg6[%c0_23, %c0_24, %c0_25, %c0_26, %c0_27, %c0_28] : memref<2x2x4x2x4x32xf32, #tpu.memory_space<vmem>>, vector<2x1x4x1x4x32xf32>
    %52 = vector.shape_cast %51 : vector<2x1x4x1x4x32xf32> to vector<2x4x4x32xf32>
    %53 = vector.shape_cast %50 : vector<2x4x4x32xf32> to vector<2x1x4x1x4x32xf32>
    tpu.vector_store %arg6[%c0_23, %c0_24, %c0_25, %c0_26, %c0_27, %c0_28], %53 {strides = array<i32>} : memref<2x2x4x2x4x32xf32, #tpu.memory_space<vmem>>, vector<2x1x4x1x4x32xf32>,
    %c0_29 = arith.constant 0 : index
    %c32 = arith.constant 32 : index
    %54 = vector.load %arg7[%c0_29, %c32] : memref<32x128xf32, #tpu.memory_space<vmem>>, vector<32x16xf32>
    %cst_30 = arith.constant dense<0.000000e+00> : vector<32xf32>
    %55 = vector.multi_reduction <add>, %54, %cst_30 [1] : vector<32x16xf32> to vector<32xf32>
    %56 = vector.shape_cast %55 : vector<32xf32> to vector<32x1xf32>
    %cst_31 = arith.constant 1.600000e+01 : f32
    %57 = vector.broadcast %cst_31 : f32 to vector<32x1xf32>
    %58 = arith.divf %56, %57 : vector<32x1xf32>
    %59 = vector.broadcast %58 : vector<32x1xf32> to vector<32x16xf32>
    %60 = arith.subf %54, %59 : vector<32x16xf32>
    %61 = arith.mulf %60, %60 : vector<32x16xf32>
    %cst_32 = arith.constant dense<0.000000e+00> : vector<32xf32>
    %62 = vector.multi_reduction <add>, %61, %cst_32 [1] : vector<32x16xf32> to vector<32xf32>
    %63 = vector.shape_cast %62 : vector<32xf32> to vector<32x1xf32>
    %cst_33 = arith.constant 1.600000e+01 : f32
    %64 = vector.broadcast %cst_33 : f32 to vector<32x1xf32>
    %65 = arith.divf %63, %64 : vector<32x1xf32>
    %cst_34 = arith.constant 9.99999974E-6 : f32
    %66 = vector.broadcast %cst_34 : f32 to vector<32x1xf32>
    %67 = arith.addf %65, %66 : vector<32x1xf32>
    %68 = math.rsqrt %67 : vector<32x1xf32>
    %69 = vector.broadcast %68 : vector<32x1xf32> to vector<32x16xf32>
    %70 = arith.mulf %60, %69 : vector<32x16xf32>
    %71 = vector.broadcast %5 : vector<1x16xf32> to vector<32x16xf32>
    %72 = arith.mulf %70, %71 : vector<32x16xf32>
    %73 = vector.broadcast %6 : vector<1x16xf32> to vector<32x16xf32>
    %74 = arith.addf %72, %73 : vector<32x16xf32>
    %c0_35 = arith.constant 0 : index
    %c48 = arith.constant 48 : index
    %75 = vector.load %arg7[%c0_35, %c48] : memref<32x128xf32, #tpu.memory_space<vmem>>, vector<32x16xf32>
    %cst_36 = arith.constant dense<0.000000e+00> : vector<32xf32>
    %76 = vector.multi_reduction <add>, %75, %cst_36 [1] : vector<32x16xf32> to vector<32xf32>
    %77 = vector.shape_cast %76 : vector<32xf32> to vector<32x1xf32>
    %cst_37 = arith.constant 1.600000e+01 : f32
    %78 = vector.broadcast %cst_37 : f32 to vector<32x1xf32>
    %79 = arith.divf %77, %78 : vector<32x1xf32>
    %80 = vector.broadcast %79 : vector<32x1xf32> to vector<32x16xf32>
    %81 = arith.subf %75, %80 : vector<32x16xf32>
    %82 = arith.mulf %81, %81 : vector<32x16xf32>
    %cst_38 = arith.constant dense<0.000000e+00> : vector<32xf32>
    %83 = vector.multi_reduction <add>, %82, %cst_38 [1] : vector<32x16xf32> to vector<32xf32>
    %84 = vector.shape_cast %83 : vector<32xf32> to vector<32x1xf32>
    %cst_39 = arith.constant 1.600000e+01 : f32
    %85 = vector.broadcast %cst_39 : f32 to vector<32x1xf32>
    %86 = arith.divf %84, %85 : vector<32x1xf32>
    %cst_40 = arith.constant 9.99999974E-6 : f32
    %87 = vector.broadcast %cst_40 : f32 to vector<32x1xf32>
    %88 = arith.addf %86, %87 : vector<32x1xf32>
    %89 = math.rsqrt %88 : vector<32x1xf32>
    %90 = vector.broadcast %89 : vector<32x1xf32> to vector<32x16xf32>
    %91 = arith.mulf %81, %90 : vector<32x16xf32>
    %92 = vector.broadcast %5 : vector<1x16xf32> to vector<32x16xf32>
    %93 = arith.mulf %91, %92 : vector<32x16xf32>
    %94 = vector.broadcast %6 : vector<1x16xf32> to vector<32x16xf32>
    %95 = arith.addf %93, %94 : vector<32x16xf32>
    %96 = tpu.concatenate %74, %95 in 1 : vector<32x16xf32>, vector<32x16xf32> -> vector<32x32xf32>
    %97 = vector.shape_cast %96 : vector<32x32xf32> to vector<2x4x4x32xf32>
    %c0_41 = arith.constant 0 : index
    %c0_42 = arith.constant 0 : index
    %c0_43 = arith.constant 0 : index
    %c1 = arith.constant 1 : index
    %c0_44 = arith.constant 0 : index
    %c0_45 = arith.constant 0 : index
    %98 = vector.load %arg6[%c0_41, %c0_42, %c0_43, %c1, %c0_44, %c0_45] : memref<2x2x4x2x4x32xf32, #tpu.memory_space<vmem>>, vector<2x1x4x1x4x32xf32>
    %99 = vector.shape_cast %98 : vector<2x1x4x1x4x32xf32> to vector<2x4x4x32xf32>
    %100 = vector.shape_cast %97 : vector<2x4x4x32xf32> to vector<2x1x4x1x4x32xf32>
    tpu.vector_store %arg6[%c0_41, %c0_42, %c0_43, %c1, %c0_44, %c0_45], %100 {strides = array<i32>} : memref<2x2x4x2x4x32xf32, #tpu.memory_space<vmem>>, vector<2x1x4x1x4x32xf32>,
    %c0_46 = arith.constant 0 : index
    %c64 = arith.constant 64 : index
    %101 = vector.load %arg7[%c0_46, %c64] : memref<32x128xf32, #tpu.memory_space<vmem>>, vector<32x16xf32>
    %cst_47 = arith.constant dense<0.000000e+00> : vector<32xf32>
    %102 = vector.multi_reduction <add>, %101, %cst_47 [1] : vector<32x16xf32> to vector<32xf32>
    %103 = vector.shape_cast %102 : vector<32xf32> to vector<32x1xf32>
    %cst_48 = arith.constant 1.600000e+01 : f32
    %104 = vector.broadcast %cst_48 : f32 to vector<32x1xf32>
    %105 = arith.divf %103, %104 : vector<32x1xf32>
    %106 = vector.broadcast %105 : vector<32x1xf32> to vector<32x16xf32>
    %107 = arith.subf %101, %106 : vector<32x16xf32>
    %108 = arith.mulf %107, %107 : vector<32x16xf32>
    %cst_49 = arith.constant dense<0.000000e+00> : vector<32xf32>
    %109 = vector.multi_reduction <add>, %108, %cst_49 [1] : vector<32x16xf32> to vector<32xf32>
    %110 = vector.shape_cast %109 : vector<32xf32> to vector<32x1xf32>
    %cst_50 = arith.constant 1.600000e+01 : f32
    %111 = vector.broadcast %cst_50 : f32 to vector<32x1xf32>
    %112 = arith.divf %110, %111 : vector<32x1xf32>
    %cst_51 = arith.constant 9.99999974E-6 : f32
    %113 = vector.broadcast %cst_51 : f32 to vector<32x1xf32>
    %114 = arith.addf %112, %113 : vector<32x1xf32>
    %115 = math.rsqrt %114 : vector<32x1xf32>
    %116 = vector.broadcast %115 : vector<32x1xf32> to vector<32x16xf32>
    %117 = arith.mulf %107, %116 : vector<32x16xf32>
    %118 = vector.broadcast %5 : vector<1x16xf32> to vector<32x16xf32>
    %119 = arith.mulf %117, %118 : vector<32x16xf32>
    %120 = vector.broadcast %6 : vector<1x16xf32> to vector<32x16xf32>
    %121 = arith.addf %119, %120 : vector<32x16xf32>
    %c0_52 = arith.constant 0 : index
    %c80 = arith.constant 80 : index
    %122 = vector.load %arg7[%c0_52, %c80] : memref<32x128xf32, #tpu.memory_space<vmem>>, vector<32x16xf32>
    %cst_53 = arith.constant dense<0.000000e+00> : vector<32xf32>
    %123 = vector.multi_reduction <add>, %122, %cst_53 [1] : vector<32x16xf32> to vector<32xf32>
    %124 = vector.shape_cast %123 : vector<32xf32> to vector<32x1xf32>
    %cst_54 = arith.constant 1.600000e+01 : f32
    %125 = vector.broadcast %cst_54 : f32 to vector<32x1xf32>
    %126 = arith.divf %124, %125 : vector<32x1xf32>
    %127 = vector.broadcast %126 : vector<32x1xf32> to vector<32x16xf32>
    %128 = arith.subf %122, %127 : vector<32x16xf32>
    %129 = arith.mulf %128, %128 : vector<32x16xf32>
    %cst_55 = arith.constant dense<0.000000e+00> : vector<32xf32>
    %130 = vector.multi_reduction <add>, %129, %cst_55 [1] : vector<32x16xf32> to vector<32xf32>
    %131 = vector.shape_cast %130 : vector<32xf32> to vector<32x1xf32>
    %cst_56 = arith.constant 1.600000e+01 : f32
    %132 = vector.broadcast %cst_56 : f32 to vector<32x1xf32>
    %133 = arith.divf %131, %132 : vector<32x1xf32>
    %cst_57 = arith.constant 9.99999974E-6 : f32
    %134 = vector.broadcast %cst_57 : f32 to vector<32x1xf32>
    %135 = arith.addf %133, %134 : vector<32x1xf32>
    %136 = math.rsqrt %135 : vector<32x1xf32>
    %137 = vector.broadcast %136 : vector<32x1xf32> to vector<32x16xf32>
    %138 = arith.mulf %128, %137 : vector<32x16xf32>
    %139 = vector.broadcast %5 : vector<1x16xf32> to vector<32x16xf32>
    %140 = arith.mulf %138, %139 : vector<32x16xf32>
    %141 = vector.broadcast %6 : vector<1x16xf32> to vector<32x16xf32>
    %142 = arith.addf %140, %141 : vector<32x16xf32>
    %143 = tpu.concatenate %121, %142 in 1 : vector<32x16xf32>, vector<32x16xf32> -> vector<32x32xf32>
    %144 = vector.shape_cast %143 : vector<32x32xf32> to vector<2x4x4x32xf32>
    %c0_58 = arith.constant 0 : index
    %c1_59 = arith.constant 1 : index
    %c0_60 = arith.constant 0 : index
    %c0_61 = arith.constant 0 : index
    %c0_62 = arith.constant 0 : index
    %c0_63 = arith.constant 0 : index
    %145 = vector.load %arg6[%c0_58, %c1_59, %c0_60, %c0_61, %c0_62, %c0_63] : memref<2x2x4x2x4x32xf32, #tpu.memory_space<vmem>>, vector<2x1x4x1x4x32xf32>
    %146 = vector.shape_cast %145 : vector<2x1x4x1x4x32xf32> to vector<2x4x4x32xf32>
    %147 = vector.shape_cast %144 : vector<2x4x4x32xf32> to vector<2x1x4x1x4x32xf32>
    tpu.vector_store %arg6[%c0_58, %c1_59, %c0_60, %c0_61, %c0_62, %c0_63], %147 {strides = array<i32>} : memref<2x2x4x2x4x32xf32, #tpu.memory_space<vmem>>, vector<2x1x4x1x4x32xf32>,
    %c0_64 = arith.constant 0 : index
    %c96 = arith.constant 96 : index
    %148 = vector.load %arg7[%c0_64, %c96] : memref<32x128xf32, #tpu.memory_space<vmem>>, vector<32x16xf32>
    %cst_65 = arith.constant dense<0.000000e+00> : vector<32xf32>
    %149 = vector.multi_reduction <add>, %148, %cst_65 [1] : vector<32x16xf32> to vector<32xf32>
    %150 = vector.shape_cast %149 : vector<32xf32> to vector<32x1xf32>
    %cst_66 = arith.constant 1.600000e+01 : f32
    %151 = vector.broadcast %cst_66 : f32 to vector<32x1xf32>
    %152 = arith.divf %150, %151 : vector<32x1xf32>
    %153 = vector.broadcast %152 : vector<32x1xf32> to vector<32x16xf32>
    %154 = arith.subf %148, %153 : vector<32x16xf32>
    %155 = arith.mulf %154, %154 : vector<32x16xf32>
    %cst_67 = arith.constant dense<0.000000e+00> : vector<32xf32>
    %156 = vector.multi_reduction <add>, %155, %cst_67 [1] : vector<32x16xf32> to vector<32xf32>
    %157 = vector.shape_cast %156 : vector<32xf32> to vector<32x1xf32>
    %cst_68 = arith.constant 1.600000e+01 : f32
    %158 = vector.broadcast %cst_68 : f32 to vector<32x1xf32>
    %159 = arith.divf %157, %158 : vector<32x1xf32>
    %cst_69 = arith.constant 9.99999974E-6 : f32
    %160 = vector.broadcast %cst_69 : f32 to vector<32x1xf32>
    %161 = arith.addf %159, %160 : vector<32x1xf32>
    %162 = math.rsqrt %161 : vector<32x1xf32>
    %163 = vector.broadcast %162 : vector<32x1xf32> to vector<32x16xf32>
    %164 = arith.mulf %154, %163 : vector<32x16xf32>
    %165 = vector.broadcast %5 : vector<1x16xf32> to vector<32x16xf32>
    %166 = arith.mulf %164, %165 : vector<32x16xf32>
    %167 = vector.broadcast %6 : vector<1x16xf32> to vector<32x16xf32>
    %168 = arith.addf %166, %167 : vector<32x16xf32>
    %c0_70 = arith.constant 0 : index
    %c112 = arith.constant 112 : index
    %169 = vector.load %arg7[%c0_70, %c112] : memref<32x128xf32, #tpu.memory_space<vmem>>, vector<32x16xf32>
    %cst_71 = arith.constant dense<0.000000e+00> : vector<32xf32>
    %170 = vector.multi_reduction <add>, %169, %cst_71 [1] : vector<32x16xf32> to vector<32xf32>
    %171 = vector.shape_cast %170 : vector<32xf32> to vector<32x1xf32>
    %cst_72 = arith.constant 1.600000e+01 : f32
    %172 = vector.broadcast %cst_72 : f32 to vector<32x1xf32>
    %173 = arith.divf %171, %172 : vector<32x1xf32>
    %174 = vector.broadcast %173 : vector<32x1xf32> to vector<32x16xf32>
    %175 = arith.subf %169, %174 : vector<32x16xf32>
    %176 = arith.mulf %175, %175 : vector<32x16xf32>
    %cst_73 = arith.constant dense<0.000000e+00> : vector<32xf32>
    %177 = vector.multi_reduction <add>, %176, %cst_73 [1] : vector<32x16xf32> to vector<32xf32>
    %178 = vector.shape_cast %177 : vector<32xf32> to vector<32x1xf32>
    %cst_74 = arith.constant 1.600000e+01 : f32
    %179 = vector.broadcast %cst_74 : f32 to vector<32x1xf32>
    %180 = arith.divf %178, %179 : vector<32x1xf32>
    %cst_75 = arith.constant 9.99999974E-6 : f32
    %181 = vector.broadcast %cst_75 : f32 to vector<32x1xf32>
    %182 = arith.addf %180, %181 : vector<32x1xf32>
    %183 = math.rsqrt %182 : vector<32x1xf32>
    %184 = vector.broadcast %183 : vector<32x1xf32> to vector<32x16xf32>
    %185 = arith.mulf %175, %184 : vector<32x16xf32>
    %186 = vector.broadcast %5 : vector<1x16xf32> to vector<32x16xf32>
    %187 = arith.mulf %185, %186 : vector<32x16xf32>
    %188 = vector.broadcast %6 : vector<1x16xf32> to vector<32x16xf32>
    %189 = arith.addf %187, %188 : vector<32x16xf32>
    %190 = tpu.concatenate %168, %189 in 1 : vector<32x16xf32>, vector<32x16xf32> -> vector<32x32xf32>
    %191 = vector.shape_cast %190 : vector<32x32xf32> to vector<2x4x4x32xf32>
    %c0_76 = arith.constant 0 : index
    %c1_77 = arith.constant 1 : index
    %c0_78 = arith.constant 0 : index
    %c1_79 = arith.constant 1 : index
    %c0_80 = arith.constant 0 : index
    %c0_81 = arith.constant 0 : index
    %192 = vector.load %arg6[%c0_76, %c1_77, %c0_78, %c1_79, %c0_80, %c0_81] : memref<2x2x4x2x4x32xf32, #tpu.memory_space<vmem>>, vector<2x1x4x1x4x32xf32>
    %193 = vector.shape_cast %192 : vector<2x1x4x1x4x32xf32> to vector<2x4x4x32xf32>
    %194 = vector.shape_cast %191 : vector<2x4x4x32xf32> to vector<2x1x4x1x4x32xf32>
    tpu.vector_store %arg6[%c0_76, %c1_77, %c0_78, %c1_79, %c0_80, %c0_81], %194 {strides = array<i32>} : memref<2x2x4x2x4x32xf32, #tpu.memory_space<vmem>>, vector<2x1x4x1x4x32xf32>,
    return
  }
  func.func @transform_0(%arg0: i32, %arg1: i32) -> (i32, i32, i32) {
    %c0_i32 = arith.constant 0 : i32
    %c0_i32_0 = arith.constant 0 : i32
    return %arg0, %arg1, %c0_i32 : i32, i32, i32
  }
  func.func @transform_1(%arg0: i32, %arg1: i32) -> (i32, i32) {
    %c0_i32 = arith.constant 0 : i32
    %c0_i32_0 = arith.constant 0 : i32
    %c0_i32_1 = arith.constant 0 : i32
    return %c0_i32, %c0_i32_0 : i32, i32
  }
  func.func @transform_2(%arg0: i32, %arg1: i32) -> (i32, i32) {
    %c0_i32 = arith.constant 0 : i32
    %c0_i32_0 = arith.constant 0 : i32
    %c0_i32_1 = arith.constant 0 : i32
    return %c0_i32, %c0_i32_0 : i32, i32
  }
  func.func @transform_3(%arg0: i32, %arg1: i32) -> (i32, i32) {
    %c0_i32 = arith.constant 0 : i32
    %c0_i32_0 = arith.constant 0 : i32
    %c0_i32_1 = arith.constant 0 : i32
    return %c0_i32, %c0_i32_0 : i32, i32
  }
  func.func @transform_4(%arg0: i32, %arg1: i32) -> (i32, i32, i32, i32, i32, i32) {
    %c0_i32 = arith.constant 0 : i32
    %c0_i32_0 = arith.constant 0 : i32
    %c0_i32_1 = arith.constant 0 : i32
    %c0_i32_2 = arith.constant 0 : i32
    %c0_i32_3 = arith.constant 0 : i32
    return %arg0, %c0_i32, %arg1, %c0_i32_0, %c0_i32_1, %c0_i32_2 : i32, i32, i32, i32, i32, i32
  }
}

</mosaic_0001>

<llo_original>
// kernel: patch_expanding_forward.1
$region0: #{patch_expanding_forward.1}
  #allocation0 [shape = 'u32[]', space=smem, size = 0x4, offset = 0x4, fixed_abs, tag = 'smem constant byte address 0x4 - core index']
  #allocation1 [shape = 'u32[144,128]{1,0:T(1,128)}', space=vmem, size = 0x12000, scoped, tag = 'internal scratch']
  #allocation2 [shape = 'f32[32,128]{1,0:T(8,128)}', space=vmem, size = 0x4000, scoped, tag = 'scratch operand']
  %s0 = inlined_call_operand.vmem [shape: f32[8,16,32], index: 0, kind: input, shape index: {}]
  %s1 = inlined_call_operand.vmem [shape: f32[32,128], index: 1, kind: input, shape index: {}]
  %s2 = inlined_call_operand.vmem [shape: f32[1,16], index: 2, kind: input, shape index: {}]
  %s3 = inlined_call_operand.vmem [shape: f32[1,16], index: 3, kind: input, shape index: {}]
  %s4 = inlined_call_operand.vmem [shape: f32[8,2,4,2,4,32], index: 4, kind: output, shape index: {}]
  %s5 = sld [smem:[#allocation0]]
  $region49: #{patch_expanding_forward.1} parent=0
    _
  %s7 = ssub.s32 1, %s5
  %s8 = scalar_select 0, %s7, %s5
  loop: start=0, step=1, limit=6
  $region2: #{patch_expanding_forward.1} parent=0 // loop_pre_header
    _
  $region3: #{patch_expanding_forward.1} parent=0 // loop_header
    %s10 = sphi 0, %s14
    %p11 = scmp.ge.s32.totalorder %s10, 6
    %s17 = sphi 0, %s29
    %s18 = sphi 0, %s25
    %s19 = sphi 0, %s17
    %s20 = sphi 0, %s18
    %s21 = sphi 0, %s19
    %s22 = sphi 0, %s20
    %s34 = sphi 0, %s36
    %s37 = sphi 0, %s34
    %s38 = sphi 0, %s37
    %s54 = sphi 0, %s38
    %s58 = sphi 0, %s58
    %s60 = sphi 0, %s58
    %s61 = sphi 0, %s60
    %s75 = sphi 0, %s61
    %s79 = sphi 0, %s79
    %s81 = sphi 0, %s79
    %s82 = sphi 0, %s81
    %s96 = sphi 0, %s82
    %s100 = sphi 0, %s100
    %s102 = sphi 0, %s100
    %s103 = sphi 0, %s102
    %s117 = sphi 0, %s103
    %s125 = sphi 0, %s127
    %s128 = sphi 0, %s125
    %s129 = sphi 0, %s128
    %s145 = sphi 0, %s129
  $region4: #{patch_expanding_forward.1} parent=0 // loop_header_branch
    %13 = sbr.rel (%p11) target = $region8
  $region5: #{patch_expanding_forward.1} parent=0 // loop_body
    %s15 = ssub.s32 %s10, 1
    %s16 = ssub.s32 %s10, 2
    %s23 = sadd.s32 1, %s18
    %p24 = scmp.ge.s32.totalorder %s23, 1
    %s25 = scalar_select %p24, 0, %s23
    %s26 = sadd.s32 1, %s17
    %s27 = scalar_select %p24, %s26, %s17
    %p28 = scmp.ge.s32.totalorder %s27, 4
    %s29 = scalar_select %p28, 0, %s27
    %s30 = ssub.s32 %s17, %s29
    %s31 = ssub.s32 %s18, %s25
    %s32 = sor.u32 %s30, %s31
    %p33 = scmp.eq.s32.totalorder %s32, 0
    %s35 = sadd.s32 %s34, 1
    %s36 = scalar_select %p33, %s34, %s35
    %p39 = pneg %p33
    %p40 = scmp.eq.s32.totalorder %s10, 3
    %p41 = por %p39, %p40
    %p42 = scmp.ne.s32.totalorder %s34, %s37
    %p43 = scmp.eq.s32.totalorder %s10, 0
    %p44 = por %p42, %p43
    %p45 = scmp.ne.s32.totalorder %s34, %s37
    %p46 = scmp.eq.s32.totalorder %s15, 3
    %p47 = por %p45, %p46
    %p48 = scmp.ne.s32.totalorder %s37, %s38
    %p49 = scmp.eq.s32.totalorder %s15, 0
    %p50 = por %p48, %p49
    %p51 = scmp.ne.s32.totalorder %s37, %s38
    %p52 = scmp.eq.s32.totalorder %s16, 3
    %p53 = por %p51, %p52
    %p55 = scmp.ne.s32.totalorder %s38, %s54
    %p56 = scmp.eq.s32.totalorder %s16, 0
    %p57 = por %p55, %p56
    %s59 = sadd.s32 %s58, 1
    %p62 = scmp.eq.s32.totalorder %s10, 3
    %p63 = scmp.ne.s32.totalorder %s58, %s60
    %p64 = scmp.eq.s32.totalorder %s10, 0
    %p65 = por %p63, %p64
    %p66 = scmp.ne.s32.totalorder %s58, %s60
    %p67 = scmp.eq.s32.totalorder %s15, 3
    %p68 = por %p66, %p67
    %p69 = scmp.ne.s32.totalorder %s60, %s61
    %p70 = scmp.eq.s32.totalorder %s15, 0
    %p71 = por %p69, %p70
    %p72 = scmp.ne.s32.totalorder %s60, %s61
    %p73 = scmp.eq.s32.totalorder %s16, 3
    %p74 = por %p72, %p73
    %p76 = scmp.ne.s32.totalorder %s61, %s75
    %p77 = scmp.eq.s32.totalorder %s16, 0
    %p78 = por %p76, %p77
    %s80 = sadd.s32 %s79, 1
    %p83 = scmp.eq.s32.totalorder %s10, 3
    %p84 = scmp.ne.s32.totalorder %s79, %s81
    %p85 = scmp.eq.s32.totalorder %s10, 0
    %p86 = por %p84, %p85
    %p87 = scmp.ne.s32.totalorder %s79, %s81
    %p88 = scmp.eq.s32.totalorder %s15, 3
    %p89 = por %p87, %p88
    %p90 = scmp.ne.s32.totalorder %s81, %s82
    %p91 = scmp.eq.s32.totalorder %s15, 0
    %p92 = por %p90, %p91
    %p93 = scmp.ne.s32.totalorder %s81, %s82
    %p94 = scmp.eq.s32.totalorder %s16, 3
    %p95 = por %p93, %p94
    %p97 = scmp.ne.s32.totalorder %s82, %s96
    %p98 = scmp.eq.s32.totalorder %s16, 0
    %p99 = por %p97, %p98
    %s101 = sadd.s32 %s100, 1
    %p104 = scmp.eq.s32.totalorder %s10, 3
    %p105 = scmp.ne.s32.totalorder %s100, %s102
    %p106 = scmp.eq.s32.totalorder %s10, 0
    %p107 = por %p105, %p106
    %p108 = scmp.ne.s32.totalorder %s100, %s102
    %p109 = scmp.eq.s32.totalorder %s15, 3
    %p110 = por %p108, %p109
    %p111 = scmp.ne.s32.totalorder %s102, %s103
    %p112 = scmp.eq.s32.totalorder %s15, 0
    %p113 = por %p111, %p112
    %p114 = scmp.ne.s32.totalorder %s102, %s103
    %p115 = scmp.eq.s32.totalorder %s16, 3
    %p116 = por %p114, %p115
    %p118 = scmp.ne.s32.totalorder %s103, %s117
    %p119 = scmp.eq.s32.totalorder %s16, 0
    %p120 = por %p118, %p119
    %s121 = ssub.s32 %s17, %s29
    %s122 = ssub.s32 %s18, %s25
    %s123 = sor.u32 %s121, %s122
    %p124 = scmp.eq.s32.totalorder %s123, 0
    %s126 = sadd.s32 %s125, 1
    %s127 = scalar_select %p124, %s125, %s126
    %p130 = pneg %p124
    %p131 = scmp.eq.s32.totalorder %s10, 3
    %p132 = por %p130, %p131
    %p133 = scmp.ne.s32.totalorder %s125, %s128
    %p134 = scmp.eq.s32.totalorder %s10, 0
    %p135 = por %p133, %p134
    %p136 = scmp.ne.s32.totalorder %s125, %s128
    %p137 = scmp.eq.s32.totalorder %s15, 3
    %p138 = por %p136, %p137
    %p139 = scmp.ne.s32.totalorder %s128, %s129
    %p140 = scmp.eq.s32.totalorder %s15, 0
    %p141 = por %p139, %p140
    %p142 = scmp.ne.s32.totalorder %s128, %s129
    %p143 = scmp.eq.s32.totalorder %s16, 3
    %p144 = por %p142, %p143
    %p146 = scmp.ne.s32.totalorder %s129, %s145
    %p147 = scmp.eq.s32.totalorder %s16, 0
    %p148 = por %p146, %p147
    %p149 = scmp.le.s32.totalorder 1, %s10
    %p150 = scmp.lt.s32.totalorder %s10, 5
    %p151 = pnand %p149, %p150
    %p152 = pneg %p151
    // Predicated region
    $region9: #{patch_expanding_forward.1} parent=5 // pred_check
      _
    $region10: #{patch_expanding_forward.1} parent=5 // pred_check_branch
      %154 = sbr.rel (%p151) target = $region12
    $region11: #{patch_expanding_forward.1} parent=5 // pred_region
      %s155 = ssub.s32 %s10, 1
      // Predicated region
      $region13: #{patch_expanding_forward.1} parent=11 // pred_check
        %p156 = pneg %p71
      $region14: #{patch_expanding_forward.1} parent=11 // pred_check_branch
        %158 = sbr.rel (%p156) target = $region16
      $region15: #{patch_expanding_forward.1} parent=11 // pred_region
        _
      $region16: #{patch_expanding_forward.1} parent=11 // pred_fallthru
        _
      // Predicated region
      $region17: #{patch_expanding_forward.1} parent=11 // pred_check
        %p159 = pneg %p92
      $region18: #{patch_expanding_forward.1} parent=11 // pred_check_branch
        %161 = sbr.rel (%p159) target = $region20
      $region19: #{patch_expanding_forward.1} parent=11 // pred_region
        _
      $region20: #{patch_expanding_forward.1} parent=11 // pred_fallthru
        _
      // Predicated region
      $region21: #{patch_expanding_forward.1} parent=11 // pred_check
        %p162 = pneg %p113
      $region22: #{patch_expanding_forward.1} parent=11 // pred_check_branch
        %164 = sbr.rel (%p162) target = $region24
      $region23: #{patch_expanding_forward.1} parent=11 // pred_region
        _
      $region24: #{patch_expanding_forward.1} parent=11 // pred_fallthru
        _
    $region12: #{patch_expanding_forward.1} parent=5 // pred_fallthru
      _
    %p165 = scmp.lt.s32.totalorder %s10, 4
    // Predicated region
    $region25: #{patch_expanding_forward.1} parent=5 // pred_check
      %p166 = pneg %p165
    $region26: #{patch_expanding_forward.1} parent=5 // pred_check_branch
      %168 = sbr.rel (%p166) target = $region28
    $region27: #{patch_expanding_forward.1} parent=5 // pred_region
      // Predicated region
      $region29: #{patch_expanding_forward.1} parent=27 // pred_check
        %p169 = pneg %p44
      $region30: #{patch_expanding_forward.1} parent=27 // pred_check_branch
        %171 = sbr.rel (%p169) target = $region32
      $region31: #{patch_expanding_forward.1} parent=27 // pred_region
        %s172 = smul.u32 2, %s17
        %s173 = smul.u32 2, %s18
        %p174 = scmp.lt.s32.totalorder %s172, 7
        %s175 = scalar_select %p174, %s172, 7
        %p176 = scmp.lt.s32.totalorder %s173, 1
        %s177 = scalar_select %p176, %s173, 1
        %s178 = smul.addr %s175, 2
        %s179 = sadd.s32 %s177, %s178
        %s180 = smul.addr %s179, 8
        %s181 = scalar_lea.vmem %s0, %s180
        %s182 = smul.u32 2, %s17
        %s183 = smul.u32 2, %s18
      $region32: #{patch_expanding_forward.1} parent=27 // pred_fallthru
        _
    $region28: #{patch_expanding_forward.1} parent=5 // pred_fallthru
      _
    %p184 = scmp.le.s32.totalorder 1, %s10
    %p185 = scmp.lt.s32.totalorder %s10, 5
    %p186 = pnand %p184, %p185
    %p187 = pneg %p186
    // Predicated region
    $region33: #{patch_expanding_forward.1} parent=5 // pred_check
      _
    $region34: #{patch_expanding_forward.1} parent=5 // pred_check_branch
      %189 = sbr.rel (%p186) target = $region36
    $region35: #{patch_expanding_forward.1} parent=5 // pred_region
      %s190 = ssub.s32 %s10, 1
      %s191 = smul.u32 2, %s19
      %s192 = smul.u32 2, %s20
      %p193 = scmp.lt.s32.totalorder %s191, 7
      %s194 = scalar_select %p193, %s191, 7
      %p195 = scmp.lt.s32.totalorder %s192, 1
      %s196 = scalar_select %p195, %s192, 1
      %s197 = smul.addr %s194, 2
      %s198 = sadd.s32 %s196, %s197
      %s199 = smul.addr %s198, 8
      %s200 = scalar_lea.vmem %s0, %s199
      %p201 = pneg %p50
      %p202 = pneg %p47
      %p203 = pneg %p71
      %p204 = pneg %p68
      %p205 = pneg %p92
      %p206 = pneg %p89
      %p207 = pneg %p113
      %p208 = pneg %p110
      %p209 = pneg %p141
      %p210 = pneg %p138
      %s211 = smul.u32 2, %s19
      %s212 = smul.u32 4, %s20
      %p213 = scmp.lt.s32.totalorder %s211, 7
      %s214 = scalar_select %p213, %s211, 7
      %p215 = scmp.lt.s32.totalorder %s212, 3
      %s216 = scalar_select %p215, %s212, 3
      %s217 = smul.addr %s216, 2
      %s218 = smul.addr %s214, 16
      %s219 = sadd.s32 %s217, %s218
      %s220 = smul.addr %s219, 4
      %s221 = scalar_lea.vmem %s4, %s220
      %s222 = smul.u32 2, %s19
      %s223 = smul.u32 2, %s20
      %p224 = scmp.lt.s32.totalorder %s222, 7
      %s225 = scalar_select %p224, %s222, 7
      %p226 = scmp.lt.s32.totalorder %s223, 1
      %s227 = scalar_select %p226, %s223, 1
      %s228 = smul.addr %s225, 2
      %s229 = sadd.s32 %s227, %s228
      %s230 = smul.addr %s229, 8
      %s231 = scalar_lea.vmem %s0, %s230
      %s232 = smul.u32 2, %s19
      %s233 = smul.u32 2, %s20
      %s234 = smul.u32 2, %s19
      %s235 = smul.u32 4, %s20
      %p236 = scmp.lt.s32.totalorder %s234, 7
      %s237 = scalar_select %p236, %s234, 7
      %p238 = scmp.lt.s32.totalorder %s235, 3
      %s239 = scalar_select %p238, %s235, 3
      %s240 = smul.addr %s239, 2
      %s241 = smul.addr %s237, 16
      %s242 = sadd.s32 %s240, %s241
      %s243 = smul.addr %s242, 4
      %s244 = scalar_lea.vmem %s4, %s243
      %s245 = smul.u32 2, %s19
      %s246 = smul.u32 4, %s20
      %v247 = vld [vmem:[%s231] sm:$0xff]
      %v248 = vld [vmem:[%s231 + $0x8] sm:$0xff]
      %v249 = vld [vmem:[%s231 + $0x10] sm:$0xff]
      %v250 = vld [vmem:[%s231 + $0x18] sm:$0xff]
      %v251 = vld [vmem:[%s1] sm:$0xff]
      %v252 = vld [vmem:[%s1 + $0x8] sm:$0xff]
      %v253 = vld [vmem:[%s1 + $0x10] sm:$0xff]
      %v254 = vld [vmem:[%s1 + $0x18] sm:$0xff]
      %vm255 = vcmask 261120
      %v257 = vsel %vm255, %v247, 0
      %v260 = vsel %vm255, %v248, 0
      %v263 = vsel %vm255, %v249, 0
      %v266 = vsel %vm255, %v250, 0
      %268 = vmatprep.subr.mxu0 0.0
      %269 = vmatpush1.msra.mxu0 %v251
      %270 = vmatprep.subr.mxu0 0.0
      %271 = vmatpush1.msra.mxu0 %v252
      %272 = vmatprep.subr.mxu0 0.0
      %273 = vmatpush1.msra.mxu0 %v253
      %274 = vmatprep.subr.mxu0 0.0
      %275 = vmatpush1.msra.mxu0 %v254
      %276 = vmatprep.subr.mxu0 0.0
      %277 = vmatpush1.msra.mxu0 0.0
      %278 = vmatprep.subr.mxu0 0.0
      %279 = vmatpush1.msra.mxu0 0.0
      %280 = vmatprep.subr.mxu0 0.0
      %281 = vmatpush1.msra.mxu0 0.0
      %282 = vmatprep.subr.mxu0 0.0
      %283 = vmatpush1.msra.mxu0 0.0
      %284 = vmatprep.subr.mxu0 0.0
      %285 = vmatpush1.msra.mxu0 0.0
      %286 = vmatprep.subr.mxu0 0.0
      %287 = vmatpush1.msra.mxu0 0.0
      %288 = vmatprep.subr.mxu0 0.0
      %289 = vmatpush1.msra.mxu0 0.0
      %290 = vmatprep.subr.mxu0 0.0
      %291 = vmatpush1.msra.mxu0 0.0
      %292 = vmatprep.subr.mxu0 0.0
      %293 = vmatpush1.msra.mxu0 0.0
      %294 = vmatprep.subr.mxu0 0.0
      %295 = vmatpush1.msra.mxu0 0.0
      %296 = vmatprep.subr.mxu0 0.0
      %297 = vmatpush1.msra.mxu0 0.0
      %298 = vmatprep.subr.mxu0 0.0
      %299 = vmatpush1.msra.mxu0 0.0
      %300 = vmatprep.subr.mxu0 0.0
      %301 = vmatpush1.msra.mxu0 0.0
      %302 = vmatprep.subr.mxu0 0.0
      %303 = vmatpush1.msra.mxu0 0.0
      %304 = vmatprep.subr.mxu0 0.0
      %305 = vmatpush1.msra.mxu0 0.0
      %306 = vmatprep.subr.mxu0 0.0
      %307 = vmatpush1.msra.mxu0 0.0
      %308 = vmatprep.subr.mxu0 0.0
      %309 = vmatpush1.msra.mxu0 0.0
      %310 = vmatprep.subr.mxu0 0.0
      %311 = vmatpush1.msra.mxu0 0.0
      %312 = vmatprep.subr.mxu0 0.0
      %313 = vmatpush1.msra.mxu0 0.0
      %314 = vmatprep.subr.mxu0 0.0
      %315 = vmatpush1.msra.mxu0 0.0
      %316 = vmatprep.subr.mxu0 0.0
      %317 = vmatpush1.msra.mxu0 0.0
      %318 = vmatprep.subr.mxu0 0.0
      %319 = vmatpush1.msra.mxu0 0.0
      %320 = vmatprep.subr.mxu0 0.0
      %321 = vmatpush1.msra.mxu0 0.0
      %322 = vmatprep.subr.mxu0 0.0
      %323 = vmatpush1.msra.mxu0 0.0
      %324 = vmatprep.subr.mxu0 0.0
      %325 = vmatpush1.msra.mxu0 0.0
      %326 = vmatprep.subr.mxu0 0.0
      %327 = vmatpush1.msra.mxu0 0.0
      %328 = vmatprep.subr.mxu0 0.0
      %329 = vmatpush1.msra.mxu0 0.0
      %330 = vmatprep.subr.mxu0 0.0
      %331 = vmatpush1.msra.mxu0 0.0
      %332 = vmatprep.mubr.f32.mxu0 0.0
      %333 = vmatmul.mubr.f32.gmra.mrb[0].mxu0 %v257
      %v334 = vpop.f32.mrb[0].mxu0
      %v335 = vadd.f32 0.0, %v334
      %v336 = vpop.f32.mrb[0].mxu0
      %337 = vmatprep.mubr.f32.mxu0 0.0
      %338 = vmatmul.mubr.f32.gmra.mrb[0].mxu0 %v260
      %v339 = vpop.f32.mrb[0].mxu0
      %v340 = vadd.f32 0.0, %v339
      %v341 = vpop.f32.mrb[0].mxu0
      %342 = vmatprep.mubr.f32.mxu0 0.0
      %343 = vmatmul.mubr.f32.gmra.mrb[0].mxu0 %v263
      %v344 = vpop.f32.mrb[0].mxu0
      %v345 = vadd.f32 0.0, %v344
      %v346 = vpop.f32.mrb[0].mxu0
      %347 = vmatprep.mubr.f32.mxu0 0.0
      %348 = vmatmul.mubr.f32.gmra.mrb[0].mxu0 %v266
      %v349 = vpop.f32.mrb[0].mxu0
      %v350 = vadd.f32 0.0, %v349
      %v351 = vpop.f32.mrb[0].mxu0
      %352 = vdwg.mxu0
      %353 = vst [vmem:[#allocation2] sm:$0xff] %v335
      %354 = vst [vmem:[#allocation2 + $0x8] sm:$0xff] %v340
      %355 = vst [vmem:[#allocation2 + $0x10] sm:$0xff] %v345
      %356 = vst [vmem:[#allocation2 + $0x18] sm:$0xff] %v350
      %v357 = vld [vmem:[%s2] sm:$0x1]
      %v358 = vld [vmem:[%s3] sm:$0x1]
      %v359 = vld [vmem:[#allocation2] sm:$0xff]
      %v360 = vld [vmem:[#allocation2 + $0x8] sm:$0xff]
      %v361 = vld [vmem:[#allocation2 + $0x10] sm:$0xff]
      %v362 = vld [vmem:[#allocation2 + $0x18] sm:$0xff]
      %vm363 = vcmask 130048
      %v364 = vsel %vm363, %v359, 0.0
      %365 = vadd.xlane.f32.xlu0 %v364
      %v366 = vpop.xlane.xlu0 %365
      %v367 = vsel %vm363, %v360, 0.0
      %368 = vadd.xlane.f32.xlu0 %v367
      %v369 = vpop.xlane.xlu0 %368
      %v370 = vsel %vm363, %v361, 0.0
      %371 = vadd.xlane.f32.xlu0 %v370
      %v372 = vpop.xlane.xlu0 %371
      %v373 = vsel %vm363, %v362, 0.0
      %374 = vadd.xlane.f32.xlu0 %v373
      %v375 = vpop.xlane.xlu0 %374
      %v376 = vrcp.pop 16.0
      %v377 = vmul.f32 %v366, %v376
      %v378 = vmul.f32 %v369, %v376
      %v379 = vmul.f32 %v372, %v376
      %v380 = vmul.f32 %v375, %v376
      %v381 = vsub.f32 %v359, %v377
      %v382 = vsub.f32 %v360, %v378
      %v383 = vsub.f32 %v361, %v379
      %v384 = vsub.f32 %v362, %v380
      %v385 = vmul.f32 %v381, %v381
      %v386 = vmul.f32 %v382, %v382
      %v387 = vmul.f32 %v383, %v383
      %v388 = vmul.f32 %v384, %v384
      %v389 = vsel %vm363, %v385, 0.0
      %390 = vadd.xlane.f32.xlu0 %v389
      %v391 = vpop.xlane.xlu0 %390
      %v392 = vsel %vm363, %v386, 0.0
      %393 = vadd.xlane.f32.xlu0 %v392
      %v394 = vpop.xlane.xlu0 %393
      %v395 = vsel %vm363, %v387, 0.0
      %396 = vadd.xlane.f32.xlu0 %v395
      %v397 = vpop.xlane.xlu0 %396
      %v398 = vsel %vm363, %v388, 0.0
      %399 = vadd.xlane.f32.xlu0 %v398
      %v400 = vpop.xlane.xlu0 %399
      %v401 = vmul.f32 %v391, %v376
      %v402 = vmul.f32 %v394, %v376
      %v403 = vmul.f32 %v397, %v376
      %v404 = vmul.f32 %v400, %v376
      %v405 = vadd.f32 %v401, 1e-05
      %v406 = vadd.f32 %v402, 1e-05
      %v407 = vadd.f32 %v403, 1e-05
      %v408 = vadd.f32 %v404, 1e-05
      %v409 = vrsqrt.pop %v405
      %v410 = vrsqrt.pop %v406
      %v411 = vrsqrt.pop %v407
      %v412 = vrsqrt.pop %v408
      %v413 = vmul.f32 %v381, %v409
      %v414 = vmul.f32 %v382, %v410
      %v415 = vmul.f32 %v383, %v411
      %v416 = vmul.f32 %v384, %v412
      %v418 = vlaneseq
      %v419 = vshrl.u32 %v418, 7
      %v420 = vsub.s32 0, %v419
      %v421 = vrot.slane %v357, %v420
      %v423 = vmul.f32 %v413, %v421
      %v424 = vmul.f32 %v414, %v421
      %v425 = vmul.f32 %v415, %v421
      %v426 = vmul.f32 %v416, %v421
      %v428 = vlaneseq
      %v429 = vshrl.u32 %v428, 7
      %v430 = vsub.s32 0, %v429
      %v431 = vrot.slane %v358, %v430
      %v433 = vadd.f32 %v423, %v431
      %v434 = vadd.f32 %v424, %v431
      %v435 = vadd.f32 %v425, %v431
      %v436 = vadd.f32 %v426, %v431
      %441 = vrot.lane.b32.xlu0 %v359, 112
      %v442 = vpop.permute.xlu0 %441
      %443 = vrot.lane.b32.xlu0 %v360, 112
      %v444 = vpop.permute.xlu0 %443
      %445 = vrot.lane.b32.xlu0 %v361, 112
      %v446 = vpop.permute.xlu0 %445
      %447 = vrot.lane.b32.xlu0 %v362, 112
      %v448 = vpop.permute.xlu0 %447
      %v453 = vsel %vm363, %v442, 0.0
      %454 = vadd.xlane.f32.xlu0 %v453
      %v455 = vpop.xlane.xlu0 %454
      %v456 = vsel %vm363, %v444, 0.0
      %457 = vadd.xlane.f32.xlu0 %v456
      %v458 = vpop.xlane.xlu0 %457
      %v459 = vsel %vm363, %v446, 0.0
      %460 = vadd.xlane.f32.xlu0 %v459
      %v461 = vpop.xlane.xlu0 %460
      %v462 = vsel %vm363, %v448, 0.0
      %463 = vadd.xlane.f32.xlu0 %v462
      %v464 = vpop.xlane.xlu0 %463
      %v465 = vmul.f32 %v455, %v376
      %v466 = vmul.f32 %v458, %v376
      %v467 = vmul.f32 %v461, %v376
      %v468 = vmul.f32 %v464, %v376
      %v469 = vsub.f32 %v359, %v465
      %v470 = vsub.f32 %v360, %v466
      %v471 = vsub.f32 %v361, %v467
      %v472 = vsub.f32 %v362, %v468
      %v473 = vmul.f32 %v469, %v469
      %v474 = vmul.f32 %v470, %v470
      %v475 = vmul.f32 %v471, %v471
      %v476 = vmul.f32 %v472, %v472
      %481 = vrot.lane.b32.xlu0 %v473, 112
      %v482 = vpop.permute.xlu0 %481
      %483 = vrot.lane.b32.xlu0 %v474, 112
      %v484 = vpop.permute.xlu0 %483
      %485 = vrot.lane.b32.xlu0 %v475, 112
      %v486 = vpop.permute.xlu0 %485
      %487 = vrot.lane.b32.xlu0 %v476, 112
      %v488 = vpop.permute.xlu0 %487
      %v493 = vsel %vm363, %v482, 0.0
      %494 = vadd.xlane.f32.xlu0 %v493
      %v495 = vpop.xlane.xlu0 %494
      %v496 = vsel %vm363, %v484, 0.0
      %497 = vadd.xlane.f32.xlu0 %v496
      %v498 = vpop.xlane.xlu0 %497
      %v499 = vsel %vm363, %v486, 0.0
      %500 = vadd.xlane.f32.xlu0 %v499
      %v501 = vpop.xlane.xlu0 %500
      %v502 = vsel %vm363, %v488, 0.0
      %503 = vadd.xlane.f32.xlu0 %v502
      %v504 = vpop.xlane.xlu0 %503
      %v505 = vmul.f32 %v495, %v376
      %v506 = vmul.f32 %v498, %v376
      %v507 = vmul.f32 %v501, %v376
      %v508 = vmul.f32 %v504, %v376
      %v509 = vadd.f32 %v505, 1e-05
      %v510 = vadd.f32 %v506, 1e-05
      %v511 = vadd.f32 %v507, 1e-05
      %v512 = vadd.f32 %v508, 1e-05
      %v513 = vrsqrt.pop %v509
      %v514 = vrsqrt.pop %v510
      %v515 = vrsqrt.pop %v511
      %v516 = vrsqrt.pop %v512
      %v517 = vmul.f32 %v469, %v513
      %v518 = vmul.f32 %v470, %v514
      %v519 = vmul.f32 %v471, %v515
      %v520 = vmul.f32 %v472, %v516
      %521 = vrot.lane.b32.xlu0 %v421, 16
      %v522 = vpop.permute.xlu0 %521
      %v524 = vmul.f32 %v517, %v522
      %v525 = vmul.f32 %v518, %v522
      %v526 = vmul.f32 %v519, %v522
      %v527 = vmul.f32 %v520, %v522
      %528 = vrot.lane.b32.xlu0 %v431, 16
      %v529 = vpop.permute.xlu0 %528
      %v531 = vadd.f32 %v524, %v529
      %v532 = vadd.f32 %v525, %v529
      %v533 = vadd.f32 %v526, %v529
      %v534 = vadd.f32 %v527, %v529
      %v535 = vsel %vm363, %v433, %v531
      %v536 = vsel %vm363, %v434, %v532
      %v537 = vsel %vm363, %v435, %v533
      %v538 = vsel %vm363, %v436, %v534
      %v543 = vcombine.high %v535, %v535
      %v544 = vcombine.high %v536, %v536
      %v545 = vcombine.high %v537, %v537
      %v546 = vcombine.high %v538, %v538
      %vm551 = vcmask 257024
      %552 = vst.msk [vmem:[%s244] sm:$0xf] %vm551, %v535
      %553 = vst.msk [vmem:[%s244 + $0x8] sm:$0xf] %vm551, %v543
      %554 = vst.msk [vmem:[%s244 + $0x10] sm:$0xf] %vm551, %v536
      %555 = vst.msk [vmem:[%s244 + $0x18] sm:$0xf] %vm551, %v544
      %556 = vst.msk [vmem:[%s244 + $0x40] sm:$0xf] %vm551, %v537
      %557 = vst.msk [vmem:[%s244 + $0x48] sm:$0xf] %vm551, %v545
      %558 = vst.msk [vmem:[%s244 + $0x50] sm:$0xf] %vm551, %v538
      %559 = vst.msk [vmem:[%s244 + $0x58] sm:$0xf] %vm551, %v546
      %v560 = vld [vmem:[#allocation2] sm:$0xff]
      %v561 = vld [vmem:[#allocation2 + $0x8] sm:$0xff]
      %v562 = vld [vmem:[#allocation2 + $0x10] sm:$0xff]
      %v563 = vld [vmem:[#allocation2 + $0x18] sm:$0xff]
      %568 = vrot.lane.b32.xlu0 %v560, 96
      %v569 = vpop.permute.xlu0 %568
      %570 = vrot.lane.b32.xlu0 %v561, 96
      %v571 = vpop.permute.xlu0 %570
      %572 = vrot.lane.b32.xlu0 %v562, 96
      %v573 = vpop.permute.xlu0 %572
      %574 = vrot.lane.b32.xlu0 %v563, 96
      %v575 = vpop.permute.xlu0 %574
      %v580 = vsel %vm363, %v569, 0.0
      %581 = vadd.xlane.f32.xlu0 %v580
      %v582 = vpop.xlane.xlu0 %581
      %v583 = vsel %vm363, %v571, 0.0
      %584 = vadd.xlane.f32.xlu0 %v583
      %v585 = vpop.xlane.xlu0 %584
      %v586 = vsel %vm363, %v573, 0.0
      %587 = vadd.xlane.f32.xlu0 %v586
      %v588 = vpop.xlane.xlu0 %587
      %v589 = vsel %vm363, %v575, 0.0
      %590 = vadd.xlane.f32.xlu0 %v589
      %v591 = vpop.xlane.xlu0 %590
      %v592 = vmul.f32 %v582, %v376
      %v593 = vmul.f32 %v585, %v376
      %v594 = vmul.f32 %v588, %v376
      %v595 = vmul.f32 %v591, %v376
      %v596 = vsub.f32 %v560, %v592
      %v597 = vsub.f32 %v561, %v593
      %v598 = vsub.f32 %v562, %v594
      %v599 = vsub.f32 %v563, %v595
      %v600 = vmul.f32 %v596, %v596
      %v601 = vmul.f32 %v597, %v597
      %v602 = vmul.f32 %v598, %v598
      %v603 = vmul.f32 %v599, %v599
      %608 = vrot.lane.b32.xlu0 %v600, 96
      %v609 = vpop.permute.xlu0 %608
      %610 = vrot.lane.b32.xlu0 %v601, 96
      %v611 = vpop.permute.xlu0 %610
      %612 = vrot.lane.b32.xlu0 %v602, 96
      %v613 = vpop.permute.xlu0 %612
      %614 = vrot.lane.b32.xlu0 %v603, 96
      %v615 = vpop.permute.xlu0 %614
      %v620 = vsel %vm363, %v609, 0.0
      %621 = vadd.xlane.f32.xlu0 %v620
      %v622 = vpop.xlane.xlu0 %621
      %v623 = vsel %vm363, %v611, 0.0
      %624 = vadd.xlane.f32.xlu0 %v623
      %v625 = vpop.xlane.xlu0 %624
      %v626 = vsel %vm363, %v613, 0.0
      %627 = vadd.xlane.f32.xlu0 %v626
      %v628 = vpop.xlane.xlu0 %627
      %v629 = vsel %vm363, %v615, 0.0
      %630 = vadd.xlane.f32.xlu0 %v629
      %v631 = vpop.xlane.xlu0 %630
      %v632 = vmul.f32 %v622, %v376
      %v633 = vmul.f32 %v625, %v376
      %v634 = vmul.f32 %v628, %v376
      %v635 = vmul.f32 %v631, %v376
      %v636 = vadd.f32 %v632, 1e-05
      %v637 = vadd.f32 %v633, 1e-05
      %v638 = vadd.f32 %v634, 1e-05
      %v639 = vadd.f32 %v635, 1e-05
      %v640 = vrsqrt.pop %v636
      %v641 = vrsqrt.pop %v637
      %v642 = vrsqrt.pop %v638
      %v643 = vrsqrt.pop %v639
      %v644 = vmul.f32 %v596, %v640
      %v645 = vmul.f32 %v597, %v641
      %v646 = vmul.f32 %v598, %v642
      %v647 = vmul.f32 %v599, %v643
      %648 = vrot.lane.b32.xlu0 %v421, 32
      %v649 = vpop.permute.xlu0 %648
      %v651 = vmul.f32 %v644, %v649
      %v652 = vmul.f32 %v645, %v649
      %v653 = vmul.f32 %v646, %v649
      %v654 = vmul.f32 %v647, %v649
      %655 = vrot.lane.b32.xlu0 %v431, 32
      %v656 = vpop.permute.xlu0 %655
      %v658 = vadd.f32 %v651, %v656
      %v659 = vadd.f32 %v652, %v656
      %v660 = vadd.f32 %v653, %v656
      %v661 = vadd.f32 %v654, %v656
      %662 = vrot.lane.b32.xlu0 %v560, 80
      %v663 = vpop.permute.xlu0 %662
      %664 = vrot.lane.b32.xlu0 %v561, 80
      %v665 = vpop.permute.xlu0 %664
      %666 = vrot.lane.b32.xlu0 %v562, 80
      %v667 = vpop.permute.xlu0 %666
      %668 = vrot.lane.b32.xlu0 %v563, 80
      %v669 = vpop.permute.xlu0 %668
      %v674 = vsel %vm363, %v663, 0.0
      %675 = vadd.xlane.f32.xlu0 %v674
      %v676 = vpop.xlane.xlu0 %675
      %v677 = vsel %vm363, %v665, 0.0
      %678 = vadd.xlane.f32.xlu0 %v677
      %v679 = vpop.xlane.xlu0 %678
      %v680 = vsel %vm363, %v667, 0.0
      %681 = vadd.xlane.f32.xlu0 %v680
      %v682 = vpop.xlane.xlu0 %681
      %v683 = vsel %vm363, %v669, 0.0
      %684 = vadd.xlane.f32.xlu0 %v683
      %v685 = vpop.xlane.xlu0 %684
      %v686 = vmul.f32 %v676, %v376
      %v687 = vmul.f32 %v679, %v376
      %v688 = vmul.f32 %v682, %v376
      %v689 = vmul.f32 %v685, %v376
      %v690 = vsub.f32 %v560, %v686
      %v691 = vsub.f32 %v561, %v687
      %v692 = vsub.f32 %v562, %v688
      %v693 = vsub.f32 %v563, %v689
      %v694 = vmul.f32 %v690, %v690
      %v695 = vmul.f32 %v691, %v691
      %v696 = vmul.f32 %v692, %v692
      %v697 = vmul.f32 %v693, %v693
      %702 = vrot.lane.b32.xlu0 %v694, 80
      %v703 = vpop.permute.xlu0 %702
      %704 = vrot.lane.b32.xlu0 %v695, 80
      %v705 = vpop.permute.xlu0 %704
      %706 = vrot.lane.b32.xlu0 %v696, 80
      %v707 = vpop.permute.xlu0 %706
      %708 = vrot.lane.b32.xlu0 %v697, 80
      %v709 = vpop.permute.xlu0 %708
      %v714 = vsel %vm363, %v703, 0.0
      %715 = vadd.xlane.f32.xlu0 %v714
      %v716 = vpop.xlane.xlu0 %715
      %v717 = vsel %vm363, %v705, 0.0
      %718 = vadd.xlane.f32.xlu0 %v717
      %v719 = vpop.xlane.xlu0 %718
      %v720 = vsel %vm363, %v707, 0.0
      %721 = vadd.xlane.f32.xlu0 %v720
      %v722 = vpop.xlane.xlu0 %721
      %v723 = vsel %vm363, %v709, 0.0
      %724 = vadd.xlane.f32.xlu0 %v723
      %v725 = vpop.xlane.xlu0 %724
      %v726 = vmul.f32 %v716, %v376
      %v727 = vmul.f32 %v719, %v376
      %v728 = vmul.f32 %v722, %v376
      %v729 = vmul.f32 %v725, %v376
      %v730 = vadd.f32 %v726, 1e-05
      %v731 = vadd.f32 %v727, 1e-05
      %v732 = vadd.f32 %v728, 1e-05
      %v733 = vadd.f32 %v729, 1e-05
      %v734 = vrsqrt.pop %v730
      %v735 = vrsqrt.pop %v731
      %v736 = vrsqrt.pop %v732
      %v737 = vrsqrt.pop %v733
      %v738 = vmul.f32 %v690, %v734
      %v739 = vmul.f32 %v691, %v735
      %v740 = vmul.f32 %v692, %v736
      %v741 = vmul.f32 %v693, %v737
      %742 = vrot.lane.b32.xlu0 %v421, 48
      %v743 = vpop.permute.xlu0 %742
      %v745 = vmul.f32 %v738, %v743
      %v746 = vmul.f32 %v739, %v743
      %v747 = vmul.f32 %v740, %v743
      %v748 = vmul.f32 %v741, %v743
      %749 = vrot.lane.b32.xlu0 %v431, 48
      %v750 = vpop.permute.xlu0 %749
      %v752 = vadd.f32 %v745, %v750
      %v753 = vadd.f32 %v746, %v750
      %v754 = vadd.f32 %v747, %v750
      %v755 = vadd.f32 %v748, %v750
      %760 = vrot.lane.b32.xlu0 %v658, 96
      %v761 = vpop.permute.xlu0 %760
      %762 = vrot.lane.b32.xlu0 %v659, 96
      %v763 = vpop.permute.xlu0 %762
      %764 = vrot.lane.b32.xlu0 %v660, 96
      %v765 = vpop.permute.xlu0 %764
      %766 = vrot.lane.b32.xlu0 %v661, 96
      %v767 = vpop.permute.xlu0 %766
      %776 = vrot.lane.b32.xlu0 %v752, 96
      %v777 = vpop.permute.xlu0 %776
      %778 = vrot.lane.b32.xlu0 %v753, 96
      %v779 = vpop.permute.xlu0 %778
      %780 = vrot.lane.b32.xlu0 %v754, 96
      %v781 = vpop.permute.xlu0 %780
      %782 = vrot.lane.b32.xlu0 %v755, 96
      %v783 = vpop.permute.xlu0 %782
      %v788 = vsel %vm363, %v761, %v777
      %v789 = vsel %vm363, %v763, %v779
      %v790 = vsel %vm363, %v765, %v781
      %v791 = vsel %vm363, %v767, %v783
      %v796 = vcombine.high %v788, %v788
      %v797 = vcombine.high %v789, %v789
      %v798 = vcombine.high %v790, %v790
      %v799 = vcombine.high %v791, %v791
      %s804 = scalar_lea.vmem %s244, 4
      %805 = vst.msk [vmem:[%s804] sm:$0xf] %vm551, %v788
      %806 = vst.msk [vmem:[%s804 + $0x8] sm:$0xf] %vm551, %v796
      %807 = vst.msk [vmem:[%s804 + $0x10] sm:$0xf] %vm551, %v789
      %808 = vst.msk [vmem:[%s804 + $0x18] sm:$0xf] %vm551, %v797
      %809 = vst.msk [vmem:[%s804 + $0x40] sm:$0xf] %vm551, %v790
      %810 = vst.msk [vmem:[%s804 + $0x48] sm:$0xf] %vm551, %v798
      %811 = vst.msk [vmem:[%s804 + $0x50] sm:$0xf] %vm551, %v791
      %812 = vst.msk [vmem:[%s804 + $0x58] sm:$0xf] %vm551, %v799
      %v813 = vld [vmem:[#allocation2] sm:$0xff]
      %v814 = vld [vmem:[#allocation2 + $0x8] sm:$0xff]
      %v815 = vld [vmem:[#allocation2 + $0x10] sm:$0xff]
      %v816 = vld [vmem:[#allocation2 + $0x18] sm:$0xff]
      %821 = vrot.lane.b32.xlu0 %v813, 64
      %v822 = vpop.permute.xlu0 %821
      %823 = vrot.lane.b32.xlu0 %v814, 64
      %v824 = vpop.permute.xlu0 %823
      %825 = vrot.lane.b32.xlu0 %v815, 64
      %v826 = vpop.permute.xlu0 %825
      %827 = vrot.lane.b32.xlu0 %v816, 64
      %v828 = vpop.permute.xlu0 %827
      %v833 = vsel %vm363, %v822, 0.0
      %834 = vadd.xlane.f32.xlu0 %v833
      %v835 = vpop.xlane.xlu0 %834
      %v836 = vsel %vm363, %v824, 0.0
      %837 = vadd.xlane.f32.xlu0 %v836
      %v838 = vpop.xlane.xlu0 %837
      %v839 = vsel %vm363, %v826, 0.0
      %840 = vadd.xlane.f32.xlu0 %v839
      %v841 = vpop.xlane.xlu0 %840
      %v842 = vsel %vm363, %v828, 0.0
      %843 = vadd.xlane.f32.xlu0 %v842
      %v844 = vpop.xlane.xlu0 %843
      %v845 = vmul.f32 %v835, %v376
      %v846 = vmul.f32 %v838, %v376
      %v847 = vmul.f32 %v841, %v376
      %v848 = vmul.f32 %v844, %v376
      %v849 = vsub.f32 %v813, %v845
      %v850 = vsub.f32 %v814, %v846
      %v851 = vsub.f32 %v815, %v847
      %v852 = vsub.f32 %v816, %v848
      %v853 = vmul.f32 %v849, %v849
      %v854 = vmul.f32 %v850, %v850
      %v855 = vmul.f32 %v851, %v851
      %v856 = vmul.f32 %v852, %v852
      %861 = vrot.lane.b32.xlu0 %v853, 64
      %v862 = vpop.permute.xlu0 %861
      %863 = vrot.lane.b32.xlu0 %v854, 64
      %v864 = vpop.permute.xlu0 %863
      %865 = vrot.lane.b32.xlu0 %v855, 64
      %v866 = vpop.permute.xlu0 %865
      %867 = vrot.lane.b32.xlu0 %v856, 64
      %v868 = vpop.permute.xlu0 %867
      %v873 = vsel %vm363, %v862, 0.0
      %874 = vadd.xlane.f32.xlu0 %v873
      %v875 = vpop.xlane.xlu0 %874
      %v876 = vsel %vm363, %v864, 0.0
      %877 = vadd.xlane.f32.xlu0 %v876
      %v878 = vpop.xlane.xlu0 %877
      %v879 = vsel %vm363, %v866, 0.0
      %880 = vadd.xlane.f32.xlu0 %v879
      %v881 = vpop.xlane.xlu0 %880
      %v882 = vsel %vm363, %v868, 0.0
      %883 = vadd.xlane.f32.xlu0 %v882
      %v884 = vpop.xlane.xlu0 %883
      %v885 = vmul.f32 %v875, %v376
      %v886 = vmul.f32 %v878, %v376
      %v887 = vmul.f32 %v881, %v376
      %v888 = vmul.f32 %v884, %v376
      %v889 = vadd.f32 %v885, 1e-05
      %v890 = vadd.f32 %v886, 1e-05
      %v891 = vadd.f32 %v887, 1e-05
      %v892 = vadd.f32 %v888, 1e-05
      %v893 = vrsqrt.pop %v889
      %v894 = vrsqrt.pop %v890
      %v895 = vrsqrt.pop %v891
      %v896 = vrsqrt.pop %v892
      %v897 = vmul.f32 %v849, %v893
      %v898 = vmul.f32 %v850, %v894
      %v899 = vmul.f32 %v851, %v895
      %v900 = vmul.f32 %v852, %v896
      %901 = vrot.lane.b32.xlu0 %v421, 64
      %v902 = vpop.permute.xlu0 %901
      %v904 = vmul.f32 %v897, %v902
      %v905 = vmul.f32 %v898, %v902
      %v906 = vmul.f32 %v899, %v902
      %v907 = vmul.f32 %v900, %v902
      %908 = vrot.lane.b32.xlu0 %v431, 64
      %v909 = vpop.permute.xlu0 %908
      %v911 = vadd.f32 %v904, %v909
      %v912 = vadd.f32 %v905, %v909
      %v913 = vadd.f32 %v906, %v909
      %v914 = vadd.f32 %v907, %v909
      %915 = vrot.lane.b32.xlu0 %v813, 48
      %v916 = vpop.permute.xlu0 %915
      %917 = vrot.lane.b32.xlu0 %v814, 48
      %v918 = vpop.permute.xlu0 %917
      %919 = vrot.lane.b32.xlu0 %v815, 48
      %v920 = vpop.permute.xlu0 %919
      %921 = vrot.lane.b32.xlu0 %v816, 48
      %v922 = vpop.permute.xlu0 %921
      %v927 = vsel %vm363, %v916, 0.0
      %928 = vadd.xlane.f32.xlu0 %v927
      %v929 = vpop.xlane.xlu0 %928
      %v930 = vsel %vm363, %v918, 0.0
      %931 = vadd.xlane.f32.xlu0 %v930
      %v932 = vpop.xlane.xlu0 %931
      %v933 = vsel %vm363, %v920, 0.0
      %934 = vadd.xlane.f32.xlu0 %v933
      %v935 = vpop.xlane.xlu0 %934
      %v936 = vsel %vm363, %v922, 0.0
      %937 = vadd.xlane.f32.xlu0 %v936
      %v938 = vpop.xlane.xlu0 %937
      %v939 = vmul.f32 %v929, %v376
      %v940 = vmul.f32 %v932, %v376
      %v941 = vmul.f32 %v935, %v376
      %v942 = vmul.f32 %v938, %v376
      %v943 = vsub.f32 %v813, %v939
      %v944 = vsub.f32 %v814, %v940
      %v945 = vsub.f32 %v815, %v941
      %v946 = vsub.f32 %v816, %v942
      %v947 = vmul.f32 %v943, %v943
      %v948 = vmul.f32 %v944, %v944
      %v949 = vmul.f32 %v945, %v945
      %v950 = vmul.f32 %v946, %v946
      %955 = vrot.lane.b32.xlu0 %v947, 48
      %v956 = vpop.permute.xlu0 %955
      %957 = vrot.lane.b32.xlu0 %v948, 48
      %v958 = vpop.permute.xlu0 %957
      %959 = vrot.lane.b32.xlu0 %v949, 48
      %v960 = vpop.permute.xlu0 %959
      %961 = vrot.lane.b32.xlu0 %v950, 48
      %v962 = vpop.permute.xlu0 %961
      %v967 = vsel %vm363, %v956, 0.0
      %968 = vadd.xlane.f32.xlu0 %v967
      %v969 = vpop.xlane.xlu0 %968
      %v970 = vsel %vm363, %v958, 0.0
      %971 = vadd.xlane.f32.xlu0 %v970
      %v972 = vpop.xlane.xlu0 %971
      %v973 = vsel %vm363, %v960, 0.0
      %974 = vadd.xlane.f32.xlu0 %v973
      %v975 = vpop.xlane.xlu0 %974
      %v976 = vsel %vm363, %v962, 0.0
      %977 = vadd.xlane.f32.xlu0 %v976
      %v978 = vpop.xlane.xlu0 %977
      %v979 = vmul.f32 %v969, %v376
      %v980 = vmul.f32 %v972, %v376
      %v981 = vmul.f32 %v975, %v376
      %v982 = vmul.f32 %v978, %v376
      %v983 = vadd.f32 %v979, 1e-05
      %v984 = vadd.f32 %v980, 1e-05
      %v985 = vadd.f32 %v981, 1e-05
      %v986 = vadd.f32 %v982, 1e-05
      %v987 = vrsqrt.pop %v983
      %v988 = vrsqrt.pop %v984
      %v989 = vrsqrt.pop %v985
      %v990 = vrsqrt.pop %v986
      %v991 = vmul.f32 %v943, %v987
      %v992 = vmul.f32 %v944, %v988
      %v993 = vmul.f32 %v945, %v989
      %v994 = vmul.f32 %v946, %v990
      %995 = vrot.lane.b32.xlu0 %v421, 80
      %v996 = vpop.permute.xlu0 %995
      %v998 = vmul.f32 %v991, %v996
      %v999 = vmul.f32 %v992, %v996
      %v1000 = vmul.f32 %v993, %v996
      %v1001 = vmul.f32 %v994, %v996
      %1002 = vrot.lane.b32.xlu0 %v431, 80
      %v1003 = vpop.permute.xlu0 %1002
      %v1005 = vadd.f32 %v998, %v1003
      %v1006 = vadd.f32 %v999, %v1003
      %v1007 = vadd.f32 %v1000, %v1003
      %v1008 = vadd.f32 %v1001, %v1003
      %1013 = vrot.lane.b32.xlu0 %v911, 64
      %v1014 = vpop.permute.xlu0 %1013
      %1015 = vrot.lane.b32.xlu0 %v912, 64
      %v1016 = vpop.permute.xlu0 %1015
      %1017 = vrot.lane.b32.xlu0 %v913, 64
      %v1018 = vpop.permute.xlu0 %1017
      %1019 = vrot.lane.b32.xlu0 %v914, 64
      %v1020 = vpop.permute.xlu0 %1019
      %1029 = vrot.lane.b32.xlu0 %v1005, 64
      %v1030 = vpop.permute.xlu0 %1029
      %1031 = vrot.lane.b32.xlu0 %v1006, 64
      %v1032 = vpop.permute.xlu0 %1031
      %1033 = vrot.lane.b32.xlu0 %v1007, 64
      %v1034 = vpop.permute.xlu0 %1033
      %1035 = vrot.lane.b32.xlu0 %v1008, 64
      %v1036 = vpop.permute.xlu0 %1035
      %v1041 = vsel %vm363, %v1014, %v1030
      %v1042 = vsel %vm363, %v1016, %v1032
      %v1043 = vsel %vm363, %v1018, %v1034
      %v1044 = vsel %vm363, %v1020, %v1036
      %v1049 = vcombine.high %v1041, %v1041
      %v1050 = vcombine.high %v1042, %v1042
      %v1051 = vcombine.high %v1043, %v1043
      %v1052 = vcombine.high %v1044, %v1044
      %s1057 = scalar_lea.vmem %s244, 32
      %1058 = vst.msk [vmem:[%s1057] sm:$0xf] %vm551, %v1041
      %1059 = vst.msk [vmem:[%s1057 + $0x8] sm:$0xf] %vm551, %v1049
      %1060 = vst.msk [vmem:[%s1057 + $0x10] sm:$0xf] %vm551, %v1042
      %1061 = vst.msk [vmem:[%s1057 + $0x18] sm:$0xf] %vm551, %v1050
      %1062 = vst.msk [vmem:[%s1057 + $0x40] sm:$0xf] %vm551, %v1043
      %1063 = vst.msk [vmem:[%s1057 + $0x48] sm:$0xf] %vm551, %v1051
      %1064 = vst.msk [vmem:[%s1057 + $0x50] sm:$0xf] %vm551, %v1044
      %1065 = vst.msk [vmem:[%s1057 + $0x58] sm:$0xf] %vm551, %v1052
      %v1066 = vld [vmem:[#allocation2] sm:$0xff]
      %v1067 = vld [vmem:[#allocation2 + $0x8] sm:$0xff]
      %v1068 = vld [vmem:[#allocation2 + $0x10] sm:$0xff]
      %v1069 = vld [vmem:[#allocation2 + $0x18] sm:$0xff]
      %1074 = vrot.lane.b32.xlu0 %v1066, 32
      %v1075 = vpop.permute.xlu0 %1074
      %1076 = vrot.lane.b32.xlu0 %v1067, 32
      %v1077 = vpop.permute.xlu0 %1076
      %1078 = vrot.lane.b32.xlu0 %v1068, 32
      %v1079 = vpop.permute.xlu0 %1078
      %1080 = vrot.lane.b32.xlu0 %v1069, 32
      %v1081 = vpop.permute.xlu0 %1080
      %v1086 = vsel %vm363, %v1075, 0.0
      %1087 = vadd.xlane.f32.xlu0 %v1086
      %v1088 = vpop.xlane.xlu0 %1087
      %v1089 = vsel %vm363, %v1077, 0.0
      %1090 = vadd.xlane.f32.xlu0 %v1089
      %v1091 = vpop.xlane.xlu0 %1090
      %v1092 = vsel %vm363, %v1079, 0.0
      %1093 = vadd.xlane.f32.xlu0 %v1092
      %v1094 = vpop.xlane.xlu0 %1093
      %v1095 = vsel %vm363, %v1081, 0.0
      %1096 = vadd.xlane.f32.xlu0 %v1095
      %v1097 = vpop.xlane.xlu0 %1096
      %v1098 = vmul.f32 %v1088, %v376
      %v1099 = vmul.f32 %v1091, %v376
      %v1100 = vmul.f32 %v1094, %v376
      %v1101 = vmul.f32 %v1097, %v376
      %v1102 = vsub.f32 %v1066, %v1098
      %v1103 = vsub.f32 %v1067, %v1099
      %v1104 = vsub.f32 %v1068, %v1100
      %v1105 = vsub.f32 %v1069, %v1101
      %v1106 = vmul.f32 %v1102, %v1102
      %v1107 = vmul.f32 %v1103, %v1103
      %v1108 = vmul.f32 %v1104, %v1104
      %v1109 = vmul.f32 %v1105, %v1105
      %1114 = vrot.lane.b32.xlu0 %v1106, 32
      %v1115 = vpop.permute.xlu0 %1114
      %1116 = vrot.lane.b32.xlu0 %v1107, 32
      %v1117 = vpop.permute.xlu0 %1116
      %1118 = vrot.lane.b32.xlu0 %v1108, 32
      %v1119 = vpop.permute.xlu0 %1118
      %1120 = vrot.lane.b32.xlu0 %v1109, 32
      %v1121 = vpop.permute.xlu0 %1120
      %v1126 = vsel %vm363, %v1115, 0.0
      %1127 = vadd.xlane.f32.xlu0 %v1126
      %v1128 = vpop.xlane.xlu0 %1127
      %v1129 = vsel %vm363, %v1117, 0.0
      %1130 = vadd.xlane.f32.xlu0 %v1129
      %v1131 = vpop.xlane.xlu0 %1130
      %v1132 = vsel %vm363, %v1119, 0.0
      %1133 = vadd.xlane.f32.xlu0 %v1132
      %v1134 = vpop.xlane.xlu0 %1133
      %v1135 = vsel %vm363, %v1121, 0.0
      %1136 = vadd.xlane.f32.xlu0 %v1135
      %v1137 = vpop.xlane.xlu0 %1136
      %v1138 = vmul.f32 %v1128, %v376
      %v1139 = vmul.f32 %v1131, %v376
      %v1140 = vmul.f32 %v1134, %v376
      %v1141 = vmul.f32 %v1137, %v376
      %v1142 = vadd.f32 %v1138, 1e-05
      %v1143 = vadd.f32 %v1139, 1e-05
      %v1144 = vadd.f32 %v1140, 1e-05
      %v1145 = vadd.f32 %v1141, 1e-05
      %v1146 = vrsqrt.pop %v1142
      %v1147 = vrsqrt.pop %v1143
      %v1148 = vrsqrt.pop %v1144
      %v1149 = vrsqrt.pop %v1145
      %v1150 = vmul.f32 %v1102, %v1146
      %v1151 = vmul.f32 %v1103, %v1147
      %v1152 = vmul.f32 %v1104, %v1148
      %v1153 = vmul.f32 %v1105, %v1149
      %1154 = vrot.lane.b32.xlu0 %v421, 96
      %v1155 = vpop.permute.xlu0 %1154
      %v1157 = vmul.f32 %v1150, %v1155
      %v1158 = vmul.f32 %v1151, %v1155
      %v1159 = vmul.f32 %v1152, %v1155
      %v1160 = vmul.f32 %v1153, %v1155
      %1161 = vrot.lane.b32.xlu0 %v431, 96
      %v1162 = vpop.permute.xlu0 %1161
      %v1164 = vadd.f32 %v1157, %v1162
      %v1165 = vadd.f32 %v1158, %v1162
      %v1166 = vadd.f32 %v1159, %v1162
      %v1167 = vadd.f32 %v1160, %v1162
      %1168 = vrot.lane.b32.xlu0 %v1066, 16
      %v1169 = vpop.permute.xlu0 %1168
      %1170 = vrot.lane.b32.xlu0 %v1067, 16
      %v1171 = vpop.permute.xlu0 %1170
      %1172 = vrot.lane.b32.xlu0 %v1068, 16
      %v1173 = vpop.permute.xlu0 %1172
      %1174 = vrot.lane.b32.xlu0 %v1069, 16
      %v1175 = vpop.permute.xlu0 %1174
      %v1180 = vsel %vm363, %v1169, 0.0
      %1181 = vadd.xlane.f32.xlu0 %v1180
      %v1182 = vpop.xlane.xlu0 %1181
      %v1183 = vsel %vm363, %v1171, 0.0
      %1184 = vadd.xlane.f32.xlu0 %v1183
      %v1185 = vpop.xlane.xlu0 %1184
      %v1186 = vsel %vm363, %v1173, 0.0
      %1187 = vadd.xlane.f32.xlu0 %v1186
      %v1188 = vpop.xlane.xlu0 %1187
      %v1189 = vsel %vm363, %v1175, 0.0
      %1190 = vadd.xlane.f32.xlu0 %v1189
      %v1191 = vpop.xlane.xlu0 %1190
      %v1192 = vmul.f32 %v1182, %v376
      %v1193 = vmul.f32 %v1185, %v376
      %v1194 = vmul.f32 %v1188, %v376
      %v1195 = vmul.f32 %v1191, %v376
      %v1196 = vsub.f32 %v1066, %v1192
      %v1197 = vsub.f32 %v1067, %v1193
      %v1198 = vsub.f32 %v1068, %v1194
      %v1199 = vsub.f32 %v1069, %v1195
      %v1200 = vmul.f32 %v1196, %v1196
      %v1201 = vmul.f32 %v1197, %v1197
      %v1202 = vmul.f32 %v1198, %v1198
      %v1203 = vmul.f32 %v1199, %v1199
      %1208 = vrot.lane.b32.xlu0 %v1200, 16
      %v1209 = vpop.permute.xlu0 %1208
      %1210 = vrot.lane.b32.xlu0 %v1201, 16
      %v1211 = vpop.permute.xlu0 %1210
      %1212 = vrot.lane.b32.xlu0 %v1202, 16
      %v1213 = vpop.permute.xlu0 %1212
      %1214 = vrot.lane.b32.xlu0 %v1203, 16
      %v1215 = vpop.permute.xlu0 %1214
      %v1220 = vsel %vm363, %v1209, 0.0
      %1221 = vadd.xlane.f32.xlu0 %v1220
      %v1222 = vpop.xlane.xlu0 %1221
      %v1223 = vsel %vm363, %v1211, 0.0
      %1224 = vadd.xlane.f32.xlu0 %v1223
      %v1225 = vpop.xlane.xlu0 %1224
      %v1226 = vsel %vm363, %v1213, 0.0
      %1227 = vadd.xlane.f32.xlu0 %v1226
      %v1228 = vpop.xlane.xlu0 %1227
      %v1229 = vsel %vm363, %v1215, 0.0
      %1230 = vadd.xlane.f32.xlu0 %v1229
      %v1231 = vpop.xlane.xlu0 %1230
      %v1232 = vmul.f32 %v1222, %v376
      %v1233 = vmul.f32 %v1225, %v376
      %v1234 = vmul.f32 %v1228, %v376
      %v1235 = vmul.f32 %v1231, %v376
      %v1236 = vadd.f32 %v1232, 1e-05
      %v1237 = vadd.f32 %v1233, 1e-05
      %v1238 = vadd.f32 %v1234, 1e-05
      %v1239 = vadd.f32 %v1235, 1e-05
      %v1240 = vrsqrt.pop %v1236
      %v1241 = vrsqrt.pop %v1237
      %v1242 = vrsqrt.pop %v1238
      %v1243 = vrsqrt.pop %v1239
      %v1244 = vmul.f32 %v1196, %v1240
      %v1245 = vmul.f32 %v1197, %v1241
      %v1246 = vmul.f32 %v1198, %v1242
      %v1247 = vmul.f32 %v1199, %v1243
      %1248 = vrot.lane.b32.xlu0 %v421, 112
      %v1249 = vpop.permute.xlu0 %1248
      %v1251 = vmul.f32 %v1244, %v1249
      %v1252 = vmul.f32 %v1245, %v1249
      %v1253 = vmul.f32 %v1246, %v1249
      %v1254 = vmul.f32 %v1247, %v1249
      %1255 = vrot.lane.b32.xlu0 %v431, 112
      %v1256 = vpop.permute.xlu0 %1255
      %v1258 = vadd.f32 %v1251, %v1256
      %v1259 = vadd.f32 %v1252, %v1256
      %v1260 = vadd.f32 %v1253, %v1256
      %v1261 = vadd.f32 %v1254, %v1256
      %1266 = vrot.lane.b32.xlu0 %v1164, 32
      %v1267 = vpop.permute.xlu0 %1266
      %1268 = vrot.lane.b32.xlu0 %v1165, 32
      %v1269 = vpop.permute.xlu0 %1268
      %1270 = vrot.lane.b32.xlu0 %v1166, 32
      %v1271 = vpop.permute.xlu0 %1270
      %1272 = vrot.lane.b32.xlu0 %v1167, 32
      %v1273 = vpop.permute.xlu0 %1272
      %1282 = vrot.lane.b32.xlu0 %v1258, 32
      %v1283 = vpop.permute.xlu0 %1282
      %1284 = vrot.lane.b32.xlu0 %v1259, 32
      %v1285 = vpop.permute.xlu0 %1284
      %1286 = vrot.lane.b32.xlu0 %v1260, 32
      %v1287 = vpop.permute.xlu0 %1286
      %1288 = vrot.lane.b32.xlu0 %v1261, 32
      %v1289 = vpop.permute.xlu0 %1288
      %v1294 = vsel %vm363, %v1267, %v1283
      %v1295 = vsel %vm363, %v1269, %v1285
      %v1296 = vsel %vm363, %v1271, %v1287
      %v1297 = vsel %vm363, %v1273, %v1289
      %v1302 = vcombine.high %v1294, %v1294
      %v1303 = vcombine.high %v1295, %v1295
      %v1304 = vcombine.high %v1296, %v1296
      %v1305 = vcombine.high %v1297, %v1297
      %s1310 = scalar_lea.vmem %s244, 36
      %1311 = vst.msk [vmem:[%s1310] sm:$0xf] %vm551, %v1294
      %1312 = vst.msk [vmem:[%s1310 + $0x8] sm:$0xf] %vm551, %v1302
      %1313 = vst.msk [vmem:[%s1310 + $0x10] sm:$0xf] %vm551, %v1295
      %1314 = vst.msk [vmem:[%s1310 + $0x18] sm:$0xf] %vm551, %v1303
      %1315 = vst.msk [vmem:[%s1310 + $0x40] sm:$0xf] %vm551, %v1296
      %1316 = vst.msk [vmem:[%s1310 + $0x48] sm:$0xf] %vm551, %v1304
      %1317 = vst.msk [vmem:[%s1310 + $0x50] sm:$0xf] %vm551, %v1297
      %1318 = vst.msk [vmem:[%s1310 + $0x58] sm:$0xf] %vm551, %v1305
      %s1319 = smul.u32 2, %s19
      %s1320 = smul.u32 4, %s20
      %p1321 = scmp.lt.s32.totalorder %s1319, 7
      %s1322 = scalar_select %p1321, %s1319, 7
      %p1323 = scmp.lt.s32.totalorder %s1320, 3
      %s1324 = scalar_select %p1323, %s1320, 3
      %s1325 = smul.addr %s1324, 2
      %s1326 = smul.addr %s1322, 16
      %s1327 = sadd.s32 %s1325, %s1326
      %s1328 = smul.addr %s1327, 4
      %s1329 = scalar_lea.vmem %s4, %s1328
      // Predicated region
      $region37: #{patch_expanding_forward.1} parent=35 // pred_check
        %p1330 = pneg %p138
      $region38: #{patch_expanding_forward.1} parent=35 // pred_check_branch
        %1332 = sbr.rel (%p1330) target = $region40
      $region39: #{patch_expanding_forward.1} parent=35 // pred_region
        %s1333 = smul.u32 2, %s19
        %s1334 = smul.u32 4, %s20
      $region40: #{patch_expanding_forward.1} parent=35 // pred_fallthru
        _
    $region36: #{patch_expanding_forward.1} parent=5 // pred_fallthru
      _
    %p1335 = scmp.le.s32.totalorder 2, %s10
    // Predicated region
    $region41: #{patch_expanding_forward.1} parent=5 // pred_check
      %p1336 = pneg %p1335
    $region42: #{patch_expanding_forward.1} parent=5 // pred_check_branch
      %1338 = sbr.rel (%p1336) target = $region44
    $region43: #{patch_expanding_forward.1} parent=5 // pred_region
      %s1339 = ssub.s32 %s10, 2
      // Predicated region
      $region45: #{patch_expanding_forward.1} parent=43 // pred_check
        %p1340 = pneg %p144
      $region46: #{patch_expanding_forward.1} parent=43 // pred_check_branch
        %1342 = sbr.rel (%p1340) target = $region48
      $region47: #{patch_expanding_forward.1} parent=43 // pred_region
        %s1343 = smul.u32 2, %s21
        %s1344 = smul.u32 4, %s22
        %p1345 = scmp.lt.s32.totalorder %s1343, 7
        %s1346 = scalar_select %p1345, %s1343, 7
        %p1347 = scmp.lt.s32.totalorder %s1344, 3
        %s1348 = scalar_select %p1347, %s1344, 3
        %s1349 = smul.addr %s1348, 2
        %s1350 = smul.addr %s1346, 16
        %s1351 = sadd.s32 %s1349, %s1350
        %s1352 = smul.addr %s1351, 4
        %s1353 = scalar_lea.vmem %s4, %s1352
      $region48: #{patch_expanding_forward.1} parent=43 // pred_fallthru
        _
    $region44: #{patch_expanding_forward.1} parent=5 // pred_fallthru
      _
  $region6: #{patch_expanding_forward.1} parent=0 // loop_footer
    %s14 = sadd.s32 1, %s10
  $region7: #{patch_expanding_forward.1} parent=0 // loop_footer_branch
    %9 = sbr.rel target = $region3
  $region8: #{patch_expanding_forward.1} parent=0 // loop_exit
    _

</llo_original>
